<compile_context>
chip_gen: v6e
topology: v6e:2x2x1
jax: 0.10.0
libtpu: 0.0.40
codegen_flags: <defaults>
</compile_context>

<pallas_src>
import jax
import jax.numpy as jnp
from jax.experimental import pallas as pl
from jax.experimental.pallas import tpu as pltpu

NUM_CATF = 32      # categorical features
NUM_CONF = 9       # continuous features
NUM_CATE = 52      # categories per categorical feature
EMB_DIM = 64
HIDDEN = 64
CAT_H1 = 256
NUM_CLASSES = 2
BN_EPS = 1e-5
CAT_IN = NUM_CATF * NUM_CATE          # 1664

CENSUS_CATEGORY = [9, 17, 3, 7, 24, 15, 5, 10, 2, 3, 6, 8, 6, 6, 51, 38, 8, 10,
                   9, 10, 3, 4, 7, 5, 43, 43, 43, 5, 3, 3, 3, 2]


# ----------------------------------------------------------------------------
# Fused kernel: whole MLP_Dc forward for one batch tile.
#   cat:  (TB,1664)@(1664,256) +b -> relu -> (TB,256)@(256,64) +b -> relu
#   con:  (TB,9)@(9,64) +b -> relu -> (TB,64)@(64,64) +b -> relu
#   head: xn@(64,2) + xc@(64,2) + b  -> softmax over 2 classes
# All weights are VMEM-resident across the batch grid (constant index_maps).
# ----------------------------------------------------------------------------
def _mlp_dc_kernel(xcat_ref, xcon_ref,
                   wc1_ref, bc1_ref, wc2_ref, bc2_ref,
                   wn1_ref, bn1_ref, wn2_ref, bn2_ref,
                   wcls_n_ref, wcls_c_ref, bcls_ref,
                   o_ref):
    f32 = jnp.float32

    # Categorical path (embedding + BN already folded into wc1/bc1).
    hc = jnp.dot(xcat_ref[...], wc1_ref[...], preferred_element_type=f32)
    hc = jnp.maximum(hc + bc1_ref[...], 0.0)
    xc = jnp.dot(hc, wc2_ref[...], preferred_element_type=f32)
    xc = jnp.maximum(xc + bc2_ref[...], 0.0)

    # Continuous path.
    hn = jnp.dot(xcon_ref[...], wn1_ref[...], preferred_element_type=f32)
    hn = jnp.maximum(hn + bn1_ref[...], 0.0)
    xn = jnp.dot(hn, wn2_ref[...], preferred_element_type=f32)
    xn = jnp.maximum(xn + bn2_ref[...], 0.0)

    # Classifier on concat([xn, xc]) done as a split matmul (no concat needed).
    z = (jnp.dot(xn, wcls_n_ref[...], preferred_element_type=f32)
         + jnp.dot(xc, wcls_c_ref[...], preferred_element_type=f32)
         + bcls_ref[...])

    # Softmax over the (tiny) class axis.
    z = z - jnp.max(z, axis=-1, keepdims=True)
    e = jnp.exp(z)
    o_ref[...] = e / jnp.sum(e, axis=-1, keepdims=True)


def _pick_batch_tile(b):
    if b >= 512:
        return 512                       # fills MXU M, ~11 MiB VMEM footprint
    return max(8, ((b + 7) // 8) * 8)    # small batches: one tile, 8-aligned


def mlp_dc_forward(fused, x_con, x_cat):
    """x_con: (B, 9) f32, x_cat: (B, 32, 52) one-hot f32 -> (B, 2) softmax."""
    B = x_cat.shape[0]
    x_cat_flat = x_cat.reshape(B, CAT_IN)

    TB = _pick_batch_tile(B)
    B_pad = pl.cdiv(B, TB) * TB
    if B_pad != B:
        pad = B_pad - B
        x_cat_flat = jnp.pad(x_cat_flat, ((0, pad), (0, 0)))
        x_con = jnp.pad(x_con, ((0, pad), (0, 0)))

    const = lambda i: (0, 0)             # weights: VMEM-resident across grid
    batch = lambda i: (i, 0)

    out = pl.pallas_call(
        _mlp_dc_kernel,
        out_shape=jax.ShapeDtypeStruct((B_pad, NUM_CLASSES), jnp.float32),
        grid=(B_pad // TB,),
        in_specs=[
            pl.BlockSpec((TB, CAT_IN), batch),             # x_cat (one-hot)
            pl.BlockSpec((TB, NUM_CONF), batch),           # x_con
            pl.BlockSpec((CAT_IN, CAT_H1), const),         # wc1 (emb+BN folded)
            pl.BlockSpec((1, CAT_H1), const),              # bc1
            pl.BlockSpec((CAT_H1, HIDDEN), const),         # wc2
            pl.BlockSpec((1, HIDDEN), const),              # bc2
            pl.BlockSpec((NUM_CONF, HIDDEN), const),       # wn1
            pl.BlockSpec((1, HIDDEN), const),              # bn1
            pl.BlockSpec((HIDDEN, HIDDEN), const),         # wn2
            pl.BlockSpec((1, HIDDEN), const),              # bn2
            pl.BlockSpec((HIDDEN, NUM_CLASSES), const),    # wcls (con half)
            pl.BlockSpec((HIDDEN, NUM_CLASSES), const),    # wcls (cat half)
            pl.BlockSpec((1, NUM_CLASSES), const),         # bcls
        ],
        out_specs=pl.BlockSpec((TB, NUM_CLASSES), batch),
        compiler_params=pltpu.CompilerParams(
            dimension_semantics=("parallel",),
            vmem_limit_bytes=32 * 1024 * 1024),
    )(x_cat_flat, x_con,
      fused["wc1"], fused["bc1"], fused["wc2"], fused["bc2"],
      fused["wn1"], fused["bn1"], fused["wn2"], fused["bn2"],
      fused["wcls_n"], fused["wcls_c"], fused["bcls"])

    return out[:B]


# ----------------------------------------------------------------------------
# Parameter setup (glue JAX, deterministic) and one-time folds.
# ----------------------------------------------------------------------------
def init_raw_params(key):
    ks = jax.random.split(key, 10)

    # Embedding table (1664, 64), N(0,1) like nn.Embedding.
    emb = jax.random.normal(ks[0], (NUM_CATF * NUM_CATE, EMB_DIM), jnp.float32)
    # Zero "empty" rows (categories beyond each feature's cardinality).
    cat_idx = jnp.arange(NUM_CATE)[None, :]
    valid = cat_idx < jnp.asarray(CENSUS_CATEGORY, jnp.int32)[:, None]  # (32,52)
    emb = emb * valid.reshape(-1, 1).astype(jnp.float32)
    # max_norm=1.0 renorm (all rows are looked up in the forward).
    norm = jnp.sqrt(jnp.sum(emb * emb, axis=1, keepdims=True))
    emb = jnp.where(norm > 1.0, emb / (norm + 1e-7), emb)
    emb3 = emb.reshape(NUM_CATF, NUM_CATE, EMB_DIM)

    def linear(k, din, dout):
        kw, kb = jax.random.split(k)
        lim = 1.0 / jnp.sqrt(jnp.float32(din))
        w = jax.random.uniform(kw, (din, dout), jnp.float32, -lim, lim)
        b = jax.random.uniform(kb, (dout,), jnp.float32, -lim, lim)
        return w, b

    def bn(k, d):
        k1, k2, k3, k4 = jax.random.split(k, 4)
        gamma = jax.random.uniform(k1, (d,), jnp.float32, 0.5, 1.5)
        beta = 0.1 * jax.random.normal(k2, (d,), jnp.float32)
        mean = 0.1 * jax.random.normal(k3, (d,), jnp.float32)
        var = jax.random.uniform(k4, (d,), jnp.float32, 0.5, 1.5)
        return gamma, beta, mean, var

    return {
        "emb": emb3,
        "cat1": linear(ks[1], NUM_CATF * EMB_DIM, CAT_H1) + bn(ks[2], CAT_H1),
        "cat2": linear(ks[3], CAT_H1, HIDDEN) + bn(ks[4], HIDDEN),
        "con1": linear(ks[5], NUM_CONF, HIDDEN) + bn(ks[6], HIDDEN),
        "con2": linear(ks[7], HIDDEN, HIDDEN) + bn(ks[8], HIDDEN),
        "cls": linear(ks[9], 2 * HIDDEN, NUM_CLASSES),
    }


def fold_params(raw):
    """Fold eval-mode BN into the linears and the embedding into cat1."""
    hi = jax.lax.Precision.HIGHEST

    def fold_bn(w, b, gamma, beta, mu, var):
        scale = gamma / jnp.sqrt(var + BN_EPS)
        return w * scale[None, :], (b - mu) * scale + beta

    wc1, bc1 = fold_bn(*raw["cat1"])
    wc2, bc2 = fold_bn(*raw["cat2"])
    wn1, bn1 = fold_bn(*raw["con1"])
    wn2, bn2 = fold_bn(*raw["con2"])

    # Embedding fold: W_fused[f*52+c, :] = emb[f, c, :] @ wc1[f*64:(f+1)*64, :]
    wc1_3 = wc1.reshape(NUM_CATF, EMB_DIM, CAT_H1)
    wc1_fused = jnp.einsum("fce,feo->fco", raw["emb"], wc1_3, precision=hi)
    wc1_fused = wc1_fused.reshape(CAT_IN, CAT_H1)

    wcls, bcls = raw["cls"]
    return {
        "wc1": wc1_fused, "bc1": bc1.reshape(1, CAT_H1),
        "wc2": wc2, "bc2": bc2.reshape(1, HIDDEN),
        "wn1": wn1, "bn1": bn1.reshape(1, HIDDEN),
        "wn2": wn2, "bn2": bn2.reshape(1, HIDDEN),
        "wcls_n": wcls[:HIDDEN], "wcls_c": wcls[HIDDEN:],
        "bcls": bcls.reshape(1, NUM_CLASSES),
    }


# ----------------------------------------------------------------------------
# Pure-JAX reference (unfused, raw params) for correctness checking.
# ----------------------------------------------------------------------------
def reference(raw, x_con, x_cat):
    hi = jax.lax.Precision.HIGHEST
    B = x_cat.shape[0]
    xc = jnp.einsum("bfc,fce->bfe", x_cat, raw["emb"], precision=hi)
    xc = xc.reshape(B, NUM_CATF * EMB_DIM)

    def lbr(x, w, b, g, bt, mu, var):
        y = jnp.dot(x, w, precision=hi) + b
        y = (y - mu) * g / jnp.sqrt(var + BN_EPS) + bt
        return jnp.maximum(y, 0.0)

    xc = lbr(xc, *raw["cat1"])
    xc = lbr(xc, *raw["cat2"])
    xn = lbr(x_con, *raw["con1"])
    xn = lbr(xn, *raw["con2"])
    h = jnp.concatenate([xn, xc], axis=1)
    z = jnp.dot(h, raw["cls"][0], precision=hi) + raw["cls"][1]
    return jax.nn.softmax(z, axis=1)


if __name__ == "__main__":
    key = jax.random.PRNGKey(0)
    kp, kcat, kcon = jax.random.split(key, 3)
    raw = init_raw_params(kp)
    fused = fold_params(raw)

    B = 8
    max_cat = jnp.asarray(CENSUS_CATEGORY, jnp.int32)[None, :]      # (1, 32)
    cats = jax.random.randint(kcat, (B, NUM_CATF), 0, max_cat)      # valid ids
    x_cat = jax.nn.one_hot(cats, NUM_CATE, dtype=jnp.float32)       # (B, 32, 52)
    x_con = jax.random.normal(kcon, (B, NUM_CONF), dtype=jnp.float32)

    out = mlp_dc_forward(fused, x_con, x_cat)
    out = jax.block_until_ready(out)
    assert out.shape == (B, NUM_CLASSES), out.shape

    ref = reference(raw, x_con, x_cat)
    max_err = float(jnp.max(jnp.abs(out - ref)))
    assert jnp.allclose(out, ref, rtol=1e-2, atol=1e-2), max_err
    assert jnp.allclose(jnp.sum(out, axis=1), 1.0, atol=1e-4)

    print("KERNEL_OK")
</pallas_src>

<mosaic_0001>
module attributes {stable_mosaic.version = 11 : i64} {
  func.func @_mlp_dc_kernel(%arg0: i32, %arg1: memref<8x1664xf32, #tpu.memory_space<vmem>>, %arg2: memref<8x9xf32, #tpu.memory_space<vmem>>, %arg3: memref<1664x256xf32, #tpu.memory_space<vmem>>, %arg4: memref<1x256xf32, #tpu.memory_space<vmem>>, %arg5: memref<256x64xf32, #tpu.memory_space<vmem>>, %arg6: memref<1x64xf32, #tpu.memory_space<vmem>>, %arg7: memref<9x64xf32, #tpu.memory_space<vmem>>, %arg8: memref<1x64xf32, #tpu.memory_space<vmem>>, %arg9: memref<64x64xf32, #tpu.memory_space<vmem>>, %arg10: memref<1x64xf32, #tpu.memory_space<vmem>>, %arg11: memref<64x2xf32, #tpu.memory_space<vmem>>, %arg12: memref<64x2xf32, #tpu.memory_space<vmem>>, %arg13: memref<1x2xf32, #tpu.memory_space<vmem>>, %arg14: memref<8x2xf32, #tpu.memory_space<vmem>>) attributes {dimension_semantics = [#tpu.dimension_semantics<parallel>], iteration_bounds = array<i64: 1>, scalar_prefetch = 0 : i64, scratch_operands = 0 : i64, tpu.core_type = #tpu.core_type<tc>, window_params = [{transform_indices = @transform_0, window_bounds = array<i64: 8, 1664>}, {transform_indices = @transform_1, window_bounds = array<i64: 8, 9>}, {pipeline_mode = #tpu.pipeline_mode<synchronous>, transform_indices = @transform_2, window_bounds = array<i64: 1664, 256>}, {pipeline_mode = #tpu.pipeline_mode<synchronous>, transform_indices = @transform_3, window_bounds = array<i64: 1, 256>}, {pipeline_mode = #tpu.pipeline_mode<synchronous>, transform_indices = @transform_4, window_bounds = array<i64: 256, 64>}, {pipeline_mode = #tpu.pipeline_mode<synchronous>, transform_indices = @transform_5, window_bounds = array<i64: 1, 64>}, {pipeline_mode = #tpu.pipeline_mode<synchronous>, transform_indices = @transform_6, window_bounds = array<i64: 9, 64>}, {pipeline_mode = #tpu.pipeline_mode<synchronous>, transform_indices = @transform_7, window_bounds = array<i64: 1, 64>}, {pipeline_mode = #tpu.pipeline_mode<synchronous>, transform_indices = @transform_8, window_bounds = array<i64: 64, 64>}, {pipeline_mode = #tpu.pipeline_mode<synchronous>, transform_indices = @transform_9, window_bounds = array<i64: 1, 64>}, {pipeline_mode = #tpu.pipeline_mode<synchronous>, transform_indices = @transform_10, window_bounds = array<i64: 64, 2>}, {pipeline_mode = #tpu.pipeline_mode<synchronous>, transform_indices = @transform_11, window_bounds = array<i64: 64, 2>}, {pipeline_mode = #tpu.pipeline_mode<synchronous>, transform_indices = @transform_12, window_bounds = array<i64: 1, 2>}, {transform_indices = @transform_13, window_bounds = array<i64: 8, 2>}]} {
    %c0 = arith.constant 0 : index
    %c0_0 = arith.constant 0 : index
    %0 = vector.load %arg1[%c0, %c0_0] : memref<8x1664xf32, #tpu.memory_space<vmem>>, vector<8x1664xf32>
    %c0_1 = arith.constant 0 : index
    %c0_2 = arith.constant 0 : index
    %1 = vector.load %arg3[%c0_1, %c0_2] : memref<1664x256xf32, #tpu.memory_space<vmem>>, vector<1664x256xf32>
    %cst = arith.constant dense<0.000000e+00> : vector<8x256xf32>
    %2 = tpu.matmul %0, %1, %cst {dimension_numbers = #tpu.dot_dimension_numbers<[1], [0], [0], [1], [0, 0, 1, 1], [], []>} : vector<8x1664xf32>, vector<1664x256xf32>, vector<8x256xf32> -> vector<8x256xf32>
    %c0_3 = arith.constant 0 : index
    %c0_4 = arith.constant 0 : index
    %3 = vector.load %arg4[%c0_3, %c0_4] : memref<1x256xf32, #tpu.memory_space<vmem>>, vector<1x256xf32>
    %4 = vector.broadcast %3 : vector<1x256xf32> to vector<8x256xf32>
    %5 = arith.addf %2, %4 : vector<8x256xf32>
    %cst_5 = arith.constant 0.000000e+00 : f32
    %6 = vector.broadcast %cst_5 : f32 to vector<8x256xf32>
    %7 = arith.maximumf %5, %6 : vector<8x256xf32>
    %c0_6 = arith.constant 0 : index
    %c0_7 = arith.constant 0 : index
    %8 = vector.load %arg5[%c0_6, %c0_7] : memref<256x64xf32, #tpu.memory_space<vmem>>, vector<256x64xf32>
    %cst_8 = arith.constant dense<0.000000e+00> : vector<8x64xf32>
    %9 = tpu.matmul %7, %8, %cst_8 {dimension_numbers = #tpu.dot_dimension_numbers<[1], [0], [0], [1], [0, 0, 1, 1], [], []>} : vector<8x256xf32>, vector<256x64xf32>, vector<8x64xf32> -> vector<8x64xf32>
    %c0_9 = arith.constant 0 : index
    %c0_10 = arith.constant 0 : index
    %10 = vector.load %arg6[%c0_9, %c0_10] : memref<1x64xf32, #tpu.memory_space<vmem>>, vector<1x64xf32>
    %11 = vector.broadcast %10 : vector<1x64xf32> to vector<8x64xf32>
    %12 = arith.addf %9, %11 : vector<8x64xf32>
    %cst_11 = arith.constant 0.000000e+00 : f32
    %13 = vector.broadcast %cst_11 : f32 to vector<8x64xf32>
    %14 = arith.maximumf %12, %13 : vector<8x64xf32>
    %c0_12 = arith.constant 0 : index
    %c0_13 = arith.constant 0 : index
    %15 = vector.load %arg2[%c0_12, %c0_13] : memref<8x9xf32, #tpu.memory_space<vmem>>, vector<8x9xf32>
    %c0_14 = arith.constant 0 : index
    %c0_15 = arith.constant 0 : index
    %16 = vector.load %arg7[%c0_14, %c0_15] : memref<9x64xf32, #tpu.memory_space<vmem>>, vector<9x64xf32>
    %cst_16 = arith.constant dense<0.000000e+00> : vector<8x64xf32>
    %17 = tpu.matmul %15, %16, %cst_16 {dimension_numbers = #tpu.dot_dimension_numbers<[1], [0], [0], [1], [0, 0, 1, 1], [], []>} : vector<8x9xf32>, vector<9x64xf32>, vector<8x64xf32> -> vector<8x64xf32>
    %c0_17 = arith.constant 0 : index
    %c0_18 = arith.constant 0 : index
    %18 = vector.load %arg8[%c0_17, %c0_18] : memref<1x64xf32, #tpu.memory_space<vmem>>, vector<1x64xf32>
    %19 = vector.broadcast %18 : vector<1x64xf32> to vector<8x64xf32>
    %20 = arith.addf %17, %19 : vector<8x64xf32>
    %cst_19 = arith.constant 0.000000e+00 : f32
    %21 = vector.broadcast %cst_19 : f32 to vector<8x64xf32>
    %22 = arith.maximumf %20, %21 : vector<8x64xf32>
    %c0_20 = arith.constant 0 : index
    %c0_21 = arith.constant 0 : index
    %23 = vector.load %arg9[%c0_20, %c0_21] : memref<64x64xf32, #tpu.memory_space<vmem>>, vector<64x64xf32>
    %cst_22 = arith.constant dense<0.000000e+00> : vector<8x64xf32>
    %24 = tpu.matmul %22, %23, %cst_22 {dimension_numbers = #tpu.dot_dimension_numbers<[1], [0], [0], [1], [0, 0, 1, 1], [], []>} : vector<8x64xf32>, vector<64x64xf32>, vector<8x64xf32> -> vector<8x64xf32>
    %c0_23 = arith.constant 0 : index
    %c0_24 = arith.constant 0 : index
    %25 = vector.load %arg10[%c0_23, %c0_24] : memref<1x64xf32, #tpu.memory_space<vmem>>, vector<1x64xf32>
    %26 = vector.broadcast %25 : vector<1x64xf32> to vector<8x64xf32>
    %27 = arith.addf %24, %26 : vector<8x64xf32>
    %cst_25 = arith.constant 0.000000e+00 : f32
    %28 = vector.broadcast %cst_25 : f32 to vector<8x64xf32>
    %29 = arith.maximumf %27, %28 : vector<8x64xf32>
    %c0_26 = arith.constant 0 : index
    %c0_27 = arith.constant 0 : index
    %30 = vector.load %arg11[%c0_26, %c0_27] : memref<64x2xf32, #tpu.memory_space<vmem>>, vector<64x2xf32>
    %cst_28 = arith.constant dense<0.000000e+00> : vector<8x2xf32>
    %31 = tpu.matmul %29, %30, %cst_28 {dimension_numbers = #tpu.dot_dimension_numbers<[1], [0], [0], [1], [0, 0, 1, 1], [], []>} : vector<8x64xf32>, vector<64x2xf32>, vector<8x2xf32> -> vector<8x2xf32>
    %c0_29 = arith.constant 0 : index
    %c0_30 = arith.constant 0 : index
    %32 = vector.load %arg12[%c0_29, %c0_30] : memref<64x2xf32, #tpu.memory_space<vmem>>, vector<64x2xf32>
    %cst_31 = arith.constant dense<0.000000e+00> : vector<8x2xf32>
    %33 = tpu.matmul %14, %32, %cst_31 {dimension_numbers = #tpu.dot_dimension_numbers<[1], [0], [0], [1], [0, 0, 1, 1], [], []>} : vector<8x64xf32>, vector<64x2xf32>, vector<8x2xf32> -> vector<8x2xf32>
    %34 = arith.addf %31, %33 : vector<8x2xf32>
    %c0_32 = arith.constant 0 : index
    %c0_33 = arith.constant 0 : index
    %35 = vector.load %arg13[%c0_32, %c0_33] : memref<1x2xf32, #tpu.memory_space<vmem>>, vector<1x2xf32>
    %36 = vector.broadcast %35 : vector<1x2xf32> to vector<8x2xf32>
    %37 = arith.addf %34, %36 : vector<8x2xf32>
    %cst_34 = arith.constant dense<0xFF800000> : vector<8xf32>
    %38 = vector.multi_reduction <maximumf>, %37, %cst_34 [1] : vector<8x2xf32> to vector<8xf32>
    %39 = vector.shape_cast %38 : vector<8xf32> to vector<8x1xf32>
    %40 = vector.broadcast %39 : vector<8x1xf32> to vector<8x2xf32>
    %41 = arith.subf %37, %40 : vector<8x2xf32>
    %42 = math.exp %41 : vector<8x2xf32>
    %cst_35 = arith.constant dense<0.000000e+00> : vector<8xf32>
    %43 = vector.multi_reduction <add>, %42, %cst_35 [1] : vector<8x2xf32> to vector<8xf32>
    %44 = vector.shape_cast %43 : vector<8xf32> to vector<8x1xf32>
    %45 = vector.broadcast %44 : vector<8x1xf32> to vector<8x2xf32>
    %46 = arith.divf %42, %45 : vector<8x2xf32>
    %c0_36 = arith.constant 0 : index
    %c0_37 = arith.constant 0 : index
    %47 = vector.load %arg14[%c0_36, %c0_37] : memref<8x2xf32, #tpu.memory_space<vmem>>, vector<8x2xf32>
    tpu.vector_store %arg14[%c0_36, %c0_37], %46 {strides = array<i32>} : memref<8x2xf32, #tpu.memory_space<vmem>>, vector<8x2xf32>,
    return
  }
  func.func @transform_0(%arg0: i32) -> (i32, i32) {
    %c0_i32 = arith.constant 0 : i32
    %c0_i32_0 = arith.constant 0 : i32
    return %arg0, %c0_i32 : i32, i32
  }
  func.func @transform_1(%arg0: i32) -> (i32, i32) {
    %c0_i32 = arith.constant 0 : i32
    %c0_i32_0 = arith.constant 0 : i32
    return %arg0, %c0_i32 : i32, i32
  }
  func.func @transform_2(%arg0: i32) -> (i32, i32) {
    %c0_i32 = arith.constant 0 : i32
    %c0_i32_0 = arith.constant 0 : i32
    %c0_i32_1 = arith.constant 0 : i32
    return %c0_i32, %c0_i32_0 : i32, i32
  }
  func.func @transform_3(%arg0: i32) -> (i32, i32) {
    %c0_i32 = arith.constant 0 : i32
    %c0_i32_0 = arith.constant 0 : i32
    %c0_i32_1 = arith.constant 0 : i32
    return %c0_i32, %c0_i32_0 : i32, i32
  }
  func.func @transform_4(%arg0: i32) -> (i32, i32) {
    %c0_i32 = arith.constant 0 : i32
    %c0_i32_0 = arith.constant 0 : i32
    %c0_i32_1 = arith.constant 0 : i32
    return %c0_i32, %c0_i32_0 : i32, i32
  }
  func.func @transform_5(%arg0: i32) -> (i32, i32) {
    %c0_i32 = arith.constant 0 : i32
    %c0_i32_0 = arith.constant 0 : i32
    %c0_i32_1 = arith.constant 0 : i32
    return %c0_i32, %c0_i32_0 : i32, i32
  }
  func.func @transform_6(%arg0: i32) -> (i32, i32) {
    %c0_i32 = arith.constant 0 : i32
    %c0_i32_0 = arith.constant 0 : i32
    %c0_i32_1 = arith.constant 0 : i32
    return %c0_i32, %c0_i32_0 : i32, i32
  }
  func.func @transform_7(%arg0: i32) -> (i32, i32) {
    %c0_i32 = arith.constant 0 : i32
    %c0_i32_0 = arith.constant 0 : i32
    %c0_i32_1 = arith.constant 0 : i32
    return %c0_i32, %c0_i32_0 : i32, i32
  }
  func.func @transform_8(%arg0: i32) -> (i32, i32) {
    %c0_i32 = arith.constant 0 : i32
    %c0_i32_0 = arith.constant 0 : i32
    %c0_i32_1 = arith.constant 0 : i32
    return %c0_i32, %c0_i32_0 : i32, i32
  }
  func.func @transform_9(%arg0: i32) -> (i32, i32) {
    %c0_i32 = arith.constant 0 : i32
    %c0_i32_0 = arith.constant 0 : i32
    %c0_i32_1 = arith.constant 0 : i32
    return %c0_i32, %c0_i32_0 : i32, i32
  }
  func.func @transform_10(%arg0: i32) -> (i32, i32) {
    %c0_i32 = arith.constant 0 : i32
    %c0_i32_0 = arith.constant 0 : i32
    %c0_i32_1 = arith.constant 0 : i32
    return %c0_i32, %c0_i32_0 : i32, i32
  }
  func.func @transform_11(%arg0: i32) -> (i32, i32) {
    %c0_i32 = arith.constant 0 : i32
    %c0_i32_0 = arith.constant 0 : i32
    %c0_i32_1 = arith.constant 0 : i32
    return %c0_i32, %c0_i32_0 : i32, i32
  }
  func.func @transform_12(%arg0: i32) -> (i32, i32) {
    %c0_i32 = arith.constant 0 : i32
    %c0_i32_0 = arith.constant 0 : i32
    %c0_i32_1 = arith.constant 0 : i32
    return %c0_i32, %c0_i32_0 : i32, i32
  }
  func.func @transform_13(%arg0: i32) -> (i32, i32) {
    %c0_i32 = arith.constant 0 : i32
    %c0_i32_0 = arith.constant 0 : i32
    return %arg0, %c0_i32 : i32, i32
  }
}

</mosaic_0001>

<llo_original>
// kernel: tpu_custom_call.1
$region0: #{tpu_custom_call.1}
  #allocation0 [shape = 'u32[]', space=smem, size = 0x4, offset = 0x4, fixed_abs, tag = 'smem constant byte address 0x4 - core index']
  #allocation1 [shape = 'u32[144,128]{1,0:T(1,128)}', space=vmem, size = 0x12000, scoped, tag = 'internal scratch']
  %s0 = inlined_call_operand.hbm [shape: f32[8,1664], index: 0, kind: input, shape index: {}]
  %s1 = inlined_call_operand.hbm [shape: f32[8,9], index: 1, kind: input, shape index: {}]
  %s2 = inlined_call_operand.hbm [shape: f32[1664,256], index: 2, kind: input, shape index: {}]
  %s3 = inlined_call_operand.hbm [shape: f32[1,256], index: 3, kind: input, shape index: {}]
  %s4 = inlined_call_operand.vmem [shape: f32[256,64], index: 4, kind: input, shape index: {}]
  %s5 = inlined_call_operand.hbm [shape: f32[1,64], index: 5, kind: input, shape index: {}]
  %s6 = inlined_call_operand.hbm [shape: f32[9,64], index: 6, kind: input, shape index: {}]
  %s7 = inlined_call_operand.hbm [shape: f32[1,64], index: 7, kind: input, shape index: {}]
  %s8 = inlined_call_operand.hbm [shape: f32[64,64], index: 8, kind: input, shape index: {}]
  %s9 = inlined_call_operand.hbm [shape: f32[1,64], index: 9, kind: input, shape index: {}]
  %s10 = inlined_call_operand.vmem [shape: f32[64,2], index: 10, kind: input, shape index: {}]
  %s11 = inlined_call_operand.vmem [shape: f32[64,2], index: 11, kind: input, shape index: {}]
  %s12 = inlined_call_operand.hbm [shape: f32[1,2], index: 12, kind: input, shape index: {}]
  %s13 = inlined_call_operand.vmem [shape: f32[8,2], index: 13, kind: output, shape index: {}]
  %s14 = sld [smem:[#allocation0]]
  $region102: #{tpu_custom_call.1} parent=0
    _
  %s16 = ssub.s32 1, %s14
  %s17 = scalar_select 0, %s16, %s14
  $region1: #{tpu_custom_call.1} parent=0
    #allocation2 [shape = 'u8[53248]{0}', space=vmem, size = 0xd000, scoped, tag = 'input window, operand 0, single buffered']
    #allocation3 [shape = 's32[1]{0}', space=sflag, size = 0x4, scoped, tag = 'scoped memory for tpu_custom_call.1']
    #allocation4 [shape = 'u8[4096]{0}', space=vmem, size = 0x1000, scoped, tag = 'input window, operand 1, single buffered']
    #allocation5 [shape = 's32[1]{0}', space=sflag, size = 0x4, scoped, tag = 'scoped memory for tpu_custom_call.1']
    #allocation6 [shape = 'u8[1703936]{0}', space=vmem, size = 0x1a0000, scoped, tag = 'input window, operand 2, single buffered']
    #allocation7 [shape = 'u8[1024]{0}', space=vmem, size = 0x400, scoped, tag = 'input window, operand 3, single buffered']
    #allocation8 [shape = 's32[1]{0}', space=sflag, size = 0x4, scoped, tag = 'scoped memory for tpu_custom_call.1']
    #allocation9 [shape = 'u8[512]{0}', space=vmem, size = 0x400, scoped, tag = 'input window, operand 5, single buffered']
    #allocation10 [shape = 'u8[8192]{0}', space=vmem, size = 0x2000, scoped, tag = 'input window, operand 6, single buffered']
    #allocation11 [shape = 's32[1]{0}', space=sflag, size = 0x4, scoped, tag = 'scoped memory for tpu_custom_call.1']
    #allocation12 [shape = 'u8[512]{0}', space=vmem, size = 0x400, scoped, tag = 'input window, operand 7, single buffered']
    #allocation13 [shape = 'u8[32768]{0}', space=vmem, size = 0x8000, scoped, tag = 'input window, operand 8, single buffered']
    #allocation14 [shape = 's32[1]{0}', space=sflag, size = 0x4, scoped, tag = 'scoped memory for tpu_custom_call.1']
    #allocation15 [shape = 'u8[512]{0}', space=vmem, size = 0x400, scoped, tag = 'input window, operand 9, single buffered']
    #allocation16 [shape = 'u8[512]{0}', space=vmem, size = 0x400, scoped, tag = 'input window, operand 12, single buffered']
    #allocation17 [shape = 's32[1]{0}', space=sflag, size = 0x4, scoped, tag = 'scoped memory for tpu_custom_call.1']
    %18 = vsyncpa [#allocation3], 0
    %19 = vsyncpa [#allocation5], 0
    %20 = vsyncpa [#allocation8], 0
    %21 = vsyncpa [#allocation11], 0
    %22 = vsyncpa [#allocation14], 0
    %23 = vsyncpa [#allocation17], 0
    // Predicated region
    $region2: #{tpu_custom_call.1} parent=1 // pred_check
      _
    $region3: #{tpu_custom_call.1} parent=1 // pred_check_branch
      %25 = sbr.rel (0) target = $region5
    $region4: #{tpu_custom_call.1} parent=1 // pred_region
      %s27 = ssub.s32 1664, 1664
      %28 = vsyncadd [#allocation3], %s27
      %s30 = sshll.u32 [#allocation2], 4
      %s31 = int_to_ptr.vmem [resolvable:$true] %s30
      %33 = dma.hbm_to_vmem [thread:$0]  %s0, 1664, %s31, [#allocation3]
    $region5: #{tpu_custom_call.1} parent=1 // pred_fallthru
      _
    // Predicated region
    $region6: #{tpu_custom_call.1} parent=1 // pred_check
      _
    $region7: #{tpu_custom_call.1} parent=1 // pred_check_branch
      %35 = sbr.rel (0) target = $region9
    $region8: #{tpu_custom_call.1} parent=1 // pred_region
      %s37 = ssub.s32 128, 128
      %38 = vsyncadd [#allocation5], %s37
      %s40 = sshll.u32 [#allocation4], 4
      %s41 = int_to_ptr.vmem [resolvable:$true] %s40
      %43 = dma.hbm_to_vmem [thread:$0]  %s1, 128, %s41, [#allocation5]
    $region9: #{tpu_custom_call.1} parent=1 // pred_fallthru
      _
    // Predicated region
    $region10: #{tpu_custom_call.1} parent=1 // pred_check
      _
    $region11: #{tpu_custom_call.1} parent=1 // pred_check_branch
      %45 = sbr.rel (0) target = $region13
    $region12: #{tpu_custom_call.1} parent=1 // pred_region
      %s47 = ssub.s32 53248, 53248
      %48 = vsyncadd [#allocation5], %s47
      %s49 = sshll.u32 [#allocation6], 4
      %s50 = int_to_ptr.vmem [resolvable:$true] %s49
      %55 = dma.hbm_to_vmem [thread:$0]  %s2, 53248, %s50, [#allocation5], 256, 256, 16
    $region13: #{tpu_custom_call.1} parent=1 // pred_fallthru
      _
    // Predicated region
    $region14: #{tpu_custom_call.1} parent=1 // pred_check
      _
    $region15: #{tpu_custom_call.1} parent=1 // pred_check_branch
      %57 = sbr.rel (0) target = $region17
    $region16: #{tpu_custom_call.1} parent=1 // pred_region
      %s59 = ssub.s32 32, 32
      %60 = vsyncadd [#allocation8], %s59
      %s62 = sshll.u32 [#allocation7], 4
      %s63 = int_to_ptr.vmem [resolvable:$true] %s62
      %65 = dma.hbm_to_vmem [thread:$0]  %s3, 32, %s63, [#allocation8]
    $region17: #{tpu_custom_call.1} parent=1 // pred_fallthru
      _
    // Predicated region
    $region18: #{tpu_custom_call.1} parent=1 // pred_check
      _
    $region19: #{tpu_custom_call.1} parent=1 // pred_check_branch
      %67 = sbr.rel (0) target = $region21
    $region20: #{tpu_custom_call.1} parent=1 // pred_region
      _
    $region21: #{tpu_custom_call.1} parent=1 // pred_fallthru
      _
    // Predicated region
    $region22: #{tpu_custom_call.1} parent=1 // pred_check
      _
    $region23: #{tpu_custom_call.1} parent=1 // pred_check_branch
      %69 = sbr.rel (0) target = $region25
    $region24: #{tpu_custom_call.1} parent=1 // pred_region
      %s71 = ssub.s32 16, 16
      %72 = vsyncadd [#allocation8], %s71
      %s74 = sshll.u32 [#allocation9], 4
      %s75 = int_to_ptr.vmem [resolvable:$true] %s74
      %77 = dma.hbm_to_vmem [thread:$0]  %s5, 16, %s75, [#allocation8]
    $region25: #{tpu_custom_call.1} parent=1 // pred_fallthru
      _
    // Predicated region
    $region26: #{tpu_custom_call.1} parent=1 // pred_check
      _
    $region27: #{tpu_custom_call.1} parent=1 // pred_check_branch
      %79 = sbr.rel (0) target = $region29
    $region28: #{tpu_custom_call.1} parent=1 // pred_region
      %s81 = ssub.s32 256, 256
      %82 = vsyncadd [#allocation11], %s81
      %s83 = sshll.u32 [#allocation10], 4
      %s84 = int_to_ptr.vmem [resolvable:$true] %s83
      %89 = dma.hbm_to_vmem [thread:$0]  %s6, 256, %s84, [#allocation11], 128, 128, 8
    $region29: #{tpu_custom_call.1} parent=1 // pred_fallthru
      _
    // Predicated region
    $region30: #{tpu_custom_call.1} parent=1 // pred_check
      _
    $region31: #{tpu_custom_call.1} parent=1 // pred_check_branch
      %91 = sbr.rel (0) target = $region33
    $region32: #{tpu_custom_call.1} parent=1 // pred_region
      %s93 = ssub.s32 16, 16
      %94 = vsyncadd [#allocation11], %s93
      %s96 = sshll.u32 [#allocation12], 4
      %s97 = int_to_ptr.vmem [resolvable:$true] %s96
      %99 = dma.hbm_to_vmem [thread:$0]  %s7, 16, %s97, [#allocation11]
    $region33: #{tpu_custom_call.1} parent=1 // pred_fallthru
      _
    // Predicated region
    $region34: #{tpu_custom_call.1} parent=1 // pred_check
      _
    $region35: #{tpu_custom_call.1} parent=1 // pred_check_branch
      %101 = sbr.rel (0) target = $region37
    $region36: #{tpu_custom_call.1} parent=1 // pred_region
      %s103 = ssub.s32 1024, 1024
      %104 = vsyncadd [#allocation14], %s103
      %s105 = sshll.u32 [#allocation13], 4
      %s106 = int_to_ptr.vmem [resolvable:$true] %s105
      %111 = dma.hbm_to_vmem [thread:$0]  %s8, 1024, %s106, [#allocation14], 128, 128, 8
    $region37: #{tpu_custom_call.1} parent=1 // pred_fallthru
      _
    // Predicated region
    $region38: #{tpu_custom_call.1} parent=1 // pred_check
      _
    $region39: #{tpu_custom_call.1} parent=1 // pred_check_branch
      %113 = sbr.rel (0) target = $region41
    $region40: #{tpu_custom_call.1} parent=1 // pred_region
      %s115 = ssub.s32 16, 16
      %116 = vsyncadd [#allocation14], %s115
      %s118 = sshll.u32 [#allocation15], 4
      %s119 = int_to_ptr.vmem [resolvable:$true] %s118
      %121 = dma.hbm_to_vmem [thread:$0]  %s9, 16, %s119, [#allocation14]
    $region41: #{tpu_custom_call.1} parent=1 // pred_fallthru
      _
    // Predicated region
    $region42: #{tpu_custom_call.1} parent=1 // pred_check
      _
    $region43: #{tpu_custom_call.1} parent=1 // pred_check_branch
      %123 = sbr.rel (0) target = $region45
    $region44: #{tpu_custom_call.1} parent=1 // pred_region
      _
    $region45: #{tpu_custom_call.1} parent=1 // pred_fallthru
      _
    // Predicated region
    $region46: #{tpu_custom_call.1} parent=1 // pred_check
      _
    $region47: #{tpu_custom_call.1} parent=1 // pred_check_branch
      %125 = sbr.rel (0) target = $region49
    $region48: #{tpu_custom_call.1} parent=1 // pred_region
      _
    $region49: #{tpu_custom_call.1} parent=1 // pred_fallthru
      _
    // Predicated region
    $region50: #{tpu_custom_call.1} parent=1 // pred_check
      _
    $region51: #{tpu_custom_call.1} parent=1 // pred_check_branch
      %127 = sbr.rel (0) target = $region53
    $region52: #{tpu_custom_call.1} parent=1 // pred_region
      %s129 = ssub.s32 16, 16
      %130 = vsyncadd [#allocation17], %s129
      %s132 = sshll.u32 [#allocation16], 4
      %s133 = int_to_ptr.vmem [resolvable:$true] %s132
      %135 = dma.hbm_to_vmem [thread:$0]  %s12, 16, %s133, [#allocation17]
    $region53: #{tpu_custom_call.1} parent=1 // pred_fallthru
      _
    // Predicated region
    $region54: #{tpu_custom_call.1} parent=1 // pred_check
      _
    $region55: #{tpu_custom_call.1} parent=1 // pred_check_branch
      %137 = sbr.rel (0) target = $region57
    $region56: #{tpu_custom_call.1} parent=1 // pred_region
      %138 = dma.done [#allocation3], 1664
    $region57: #{tpu_custom_call.1} parent=1 // pred_fallthru
      _
    // Predicated region
    $region58: #{tpu_custom_call.1} parent=1 // pred_check
      _
    $region59: #{tpu_custom_call.1} parent=1 // pred_check_branch
      %140 = sbr.rel (0) target = $region61
    $region60: #{tpu_custom_call.1} parent=1 // pred_region
      %141 = dma.done [#allocation5], 128
    $region61: #{tpu_custom_call.1} parent=1 // pred_fallthru
      _
    // Predicated region
    $region62: #{tpu_custom_call.1} parent=1 // pred_check
      _
    $region63: #{tpu_custom_call.1} parent=1 // pred_check_branch
      %143 = sbr.rel (0) target = $region65
    $region64: #{tpu_custom_call.1} parent=1 // pred_region
      %144 = dma.done [#allocation5], 53248
    $region65: #{tpu_custom_call.1} parent=1 // pred_fallthru
      _
    // Predicated region
    $region66: #{tpu_custom_call.1} parent=1 // pred_check
      _
    $region67: #{tpu_custom_call.1} parent=1 // pred_check_branch
      %146 = sbr.rel (0) target = $region69
    $region68: #{tpu_custom_call.1} parent=1 // pred_region
      %147 = dma.done [#allocation8], 32
    $region69: #{tpu_custom_call.1} parent=1 // pred_fallthru
      _
    // Predicated region
    $region70: #{tpu_custom_call.1} parent=1 // pred_check
      _
    $region71: #{tpu_custom_call.1} parent=1 // pred_check_branch
      %149 = sbr.rel (0) target = $region73
    $region72: #{tpu_custom_call.1} parent=1 // pred_region
      %150 = dma.done [#allocation8], 16
    $region73: #{tpu_custom_call.1} parent=1 // pred_fallthru
      _
    // Predicated region
    $region74: #{tpu_custom_call.1} parent=1 // pred_check
      _
    $region75: #{tpu_custom_call.1} parent=1 // pred_check_branch
      %152 = sbr.rel (0) target = $region77
    $region76: #{tpu_custom_call.1} parent=1 // pred_region
      %153 = dma.done [#allocation11], 256
    $region77: #{tpu_custom_call.1} parent=1 // pred_fallthru
      _
    // Predicated region
    $region78: #{tpu_custom_call.1} parent=1 // pred_check
      _
    $region79: #{tpu_custom_call.1} parent=1 // pred_check_branch
      %155 = sbr.rel (0) target = $region81
    $region80: #{tpu_custom_call.1} parent=1 // pred_region
      %156 = dma.done [#allocation11], 16
    $region81: #{tpu_custom_call.1} parent=1 // pred_fallthru
      _
    // Predicated region
    $region82: #{tpu_custom_call.1} parent=1 // pred_check
      _
    $region83: #{tpu_custom_call.1} parent=1 // pred_check_branch
      %158 = sbr.rel (0) target = $region85
    $region84: #{tpu_custom_call.1} parent=1 // pred_region
      %159 = dma.done [#allocation14], 1024
    $region85: #{tpu_custom_call.1} parent=1 // pred_fallthru
      _
    // Predicated region
    $region86: #{tpu_custom_call.1} parent=1 // pred_check
      _
    $region87: #{tpu_custom_call.1} parent=1 // pred_check_branch
      %161 = sbr.rel (0) target = $region89
    $region88: #{tpu_custom_call.1} parent=1 // pred_region
      %162 = dma.done [#allocation14], 16
    $region89: #{tpu_custom_call.1} parent=1 // pred_fallthru
      _
    // Predicated region
    $region90: #{tpu_custom_call.1} parent=1 // pred_check
      _
    $region91: #{tpu_custom_call.1} parent=1 // pred_check_branch
      %164 = sbr.rel (0) target = $region93
    $region92: #{tpu_custom_call.1} parent=1 // pred_region
      %165 = dma.done [#allocation17], 16
    $region93: #{tpu_custom_call.1} parent=1 // pred_fallthru
      _
    %v166 = vld [vmem:[#allocation2] sm:$0xff]
    %v167 = vld [vmem:[#allocation2 + $0x8] sm:$0xff]
    %v168 = vld [vmem:[#allocation2 + $0x10] sm:$0xff]
    %v169 = vld [vmem:[#allocation2 + $0x18] sm:$0xff]
    %v170 = vld [vmem:[#allocation2 + $0x20] sm:$0xff]
    %v171 = vld [vmem:[#allocation2 + $0x28] sm:$0xff]
    %v172 = vld [vmem:[#allocation2 + $0x30] sm:$0xff]
    %v173 = vld [vmem:[#allocation2 + $0x38] sm:$0xff]
    %v174 = vld [vmem:[#allocation2 + $0x40] sm:$0xff]
    %v175 = vld [vmem:[#allocation2 + $0x48] sm:$0xff]
    %v176 = vld [vmem:[#allocation2 + $0x50] sm:$0xff]
    %v177 = vld [vmem:[#allocation2 + $0x58] sm:$0xff]
    %v178 = vld [vmem:[#allocation2 + $0x60] sm:$0xff]
    %v179 = vld [vmem:[#allocation6] sm:$0xff]
    %v180 = vld [vmem:[#allocation6 + $0x8] sm:$0xff]
    %v181 = vld [vmem:[#allocation6 + $0x10] sm:$0xff]
    %v182 = vld [vmem:[#allocation6 + $0x18] sm:$0xff]
    %v183 = vld [vmem:[#allocation6 + $0x20] sm:$0xff]
    %v184 = vld [vmem:[#allocation6 + $0x28] sm:$0xff]
    %v185 = vld [vmem:[#allocation6 + $0x30] sm:$0xff]
    %v186 = vld [vmem:[#allocation6 + $0x38] sm:$0xff]
    %v187 = vld [vmem:[#allocation6 + $0x40] sm:$0xff]
    %v188 = vld [vmem:[#allocation6 + $0x48] sm:$0xff]
    %v189 = vld [vmem:[#allocation6 + $0x50] sm:$0xff]
    %v190 = vld [vmem:[#allocation6 + $0x58] sm:$0xff]
    %v191 = vld [vmem:[#allocation6 + $0x60] sm:$0xff]
    %v192 = vld [vmem:[#allocation6 + $0x68] sm:$0xff]
    %v193 = vld [vmem:[#allocation6 + $0x70] sm:$0xff]
    %v194 = vld [vmem:[#allocation6 + $0x78] sm:$0xff]
    %v195 = vld [vmem:[#allocation6 + $0x80] sm:$0xff]
    %v196 = vld [vmem:[#allocation6 + $0x88] sm:$0xff]
    %v197 = vld [vmem:[#allocation6 + $0x90] sm:$0xff]
    %v198 = vld [vmem:[#allocation6 + $0x98] sm:$0xff]
    %v199 = vld [vmem:[#allocation6 + $0xa0] sm:$0xff]
    %v200 = vld [vmem:[#allocation6 + $0xa8] sm:$0xff]
    %v201 = vld [vmem:[#allocation6 + $0xb0] sm:$0xff]
    %v202 = vld [vmem:[#allocation6 + $0xb8] sm:$0xff]
    %v203 = vld [vmem:[#allocation6 + $0xc0] sm:$0xff]
    %v204 = vld [vmem:[#allocation6 + $0xc8] sm:$0xff]
    %v205 = vld [vmem:[#allocation6 + $0xd0] sm:$0xff]
    %v206 = vld [vmem:[#allocation6 + $0xd8] sm:$0xff]
    %v207 = vld [vmem:[#allocation6 + $0xe0] sm:$0xff]
    %v208 = vld [vmem:[#allocation6 + $0xe8] sm:$0xff]
    %v209 = vld [vmem:[#allocation6 + $0xf0] sm:$0xff]
    %v210 = vld [vmem:[#allocation6 + $0xf8] sm:$0xff]
    %v211 = vld [vmem:[#allocation6 + $0x100] sm:$0xff]
    %v212 = vld [vmem:[#allocation6 + $0x108] sm:$0xff]
    %v213 = vld [vmem:[#allocation6 + $0x110] sm:$0xff]
    %v214 = vld [vmem:[#allocation6 + $0x118] sm:$0xff]
    %v215 = vld [vmem:[#allocation6 + $0x120] sm:$0xff]
    %v216 = vld [vmem:[#allocation6 + $0x128] sm:$0xff]
    %v217 = vld [vmem:[#allocation6 + $0x130] sm:$0xff]
    %v218 = vld [vmem:[#allocation6 + $0x138] sm:$0xff]
    %v219 = vld [vmem:[#allocation6 + $0x140] sm:$0xff]
    %v220 = vld [vmem:[#allocation6 + $0x148] sm:$0xff]
    %v221 = vld [vmem:[#allocation6 + $0x150] sm:$0xff]
    %v222 = vld [vmem:[#allocation6 + $0x158] sm:$0xff]
    %v223 = vld [vmem:[#allocation6 + $0x160] sm:$0xff]
    %v224 = vld [vmem:[#allocation6 + $0x168] sm:$0xff]
    %v225 = vld [vmem:[#allocation6 + $0x170] sm:$0xff]
    %v226 = vld [vmem:[#allocation6 + $0x178] sm:$0xff]
    %v227 = vld [vmem:[#allocation6 + $0x180] sm:$0xff]
    %v228 = vld [vmem:[#allocation6 + $0x188] sm:$0xff]
    %v229 = vld [vmem:[#allocation6 + $0x190] sm:$0xff]
    %v230 = vld [vmem:[#allocation6 + $0x198] sm:$0xff]
    %v231 = vld [vmem:[#allocation6 + $0x1a0] sm:$0xff]
    %v232 = vld [vmem:[#allocation6 + $0x1a8] sm:$0xff]
    %v233 = vld [vmem:[#allocation6 + $0x1b0] sm:$0xff]
    %v234 = vld [vmem:[#allocation6 + $0x1b8] sm:$0xff]
    %v235 = vld [vmem:[#allocation6 + $0x1c0] sm:$0xff]
    %v236 = vld [vmem:[#allocation6 + $0x1c8] sm:$0xff]
    %v237 = vld [vmem:[#allocation6 + $0x1d0] sm:$0xff]
    %v238 = vld [vmem:[#allocation6 + $0x1d8] sm:$0xff]
    %v239 = vld [vmem:[#allocation6 + $0x1e0] sm:$0xff]
    %v240 = vld [vmem:[#allocation6 + $0x1e8] sm:$0xff]
    %v241 = vld [vmem:[#allocation6 + $0x1f0] sm:$0xff]
    %v242 = vld [vmem:[#allocation6 + $0x1f8] sm:$0xff]
    %v243 = vld [vmem:[#allocation6 + $0x200] sm:$0xff]
    %v244 = vld [vmem:[#allocation6 + $0x208] sm:$0xff]
    %v245 = vld [vmem:[#allocation6 + $0x210] sm:$0xff]
    %v246 = vld [vmem:[#allocation6 + $0x218] sm:$0xff]
    %v247 = vld [vmem:[#allocation6 + $0x220] sm:$0xff]
    %v248 = vld [vmem:[#allocation6 + $0x228] sm:$0xff]
    %v249 = vld [vmem:[#allocation6 + $0x230] sm:$0xff]
    %v250 = vld [vmem:[#allocation6 + $0x238] sm:$0xff]
    %v251 = vld [vmem:[#allocation6 + $0x240] sm:$0xff]
    %v252 = vld [vmem:[#allocation6 + $0x248] sm:$0xff]
    %v253 = vld [vmem:[#allocation6 + $0x250] sm:$0xff]
    %v254 = vld [vmem:[#allocation6 + $0x258] sm:$0xff]
    %v255 = vld [vmem:[#allocation6 + $0x260] sm:$0xff]
    %v256 = vld [vmem:[#allocation6 + $0x268] sm:$0xff]
    %v257 = vld [vmem:[#allocation6 + $0x270] sm:$0xff]
    %v258 = vld [vmem:[#allocation6 + $0x278] sm:$0xff]
    %v259 = vld [vmem:[#allocation6 + $0x280] sm:$0xff]
    %v260 = vld [vmem:[#allocation6 + $0x288] sm:$0xff]
    %v261 = vld [vmem:[#allocation6 + $0x290] sm:$0xff]
    %v262 = vld [vmem:[#allocation6 + $0x298] sm:$0xff]
    %v263 = vld [vmem:[#allocation6 + $0x2a0] sm:$0xff]
    %v264 = vld [vmem:[#allocation6 + $0x2a8] sm:$0xff]
    %v265 = vld [vmem:[#allocation6 + $0x2b0] sm:$0xff]
    %v266 = vld [vmem:[#allocation6 + $0x2b8] sm:$0xff]
    %v267 = vld [vmem:[#allocation6 + $0x2c0] sm:$0xff]
    %v268 = vld [vmem:[#allocation6 + $0x2c8] sm:$0xff]
    %v269 = vld [vmem:[#allocation6 + $0x2d0] sm:$0xff]
    %v270 = vld [vmem:[#allocation6 + $0x2d8] sm:$0xff]
    %v271 = vld [vmem:[#allocation6 + $0x2e0] sm:$0xff]
    %v272 = vld [vmem:[#allocation6 + $0x2e8] sm:$0xff]
    %v273 = vld [vmem:[#allocation6 + $0x2f0] sm:$0xff]
    %v274 = vld [vmem:[#allocation6 + $0x2f8] sm:$0xff]
    %v275 = vld [vmem:[#allocation6 + $0x300] sm:$0xff]
    %v276 = vld [vmem:[#allocation6 + $0x308] sm:$0xff]
    %v277 = vld [vmem:[#allocation6 + $0x310] sm:$0xff]
    %v278 = vld [vmem:[#allocation6 + $0x318] sm:$0xff]
    %v279 = vld [vmem:[#allocation6 + $0x320] sm:$0xff]
    %v280 = vld [vmem:[#allocation6 + $0x328] sm:$0xff]
    %v281 = vld [vmem:[#allocation6 + $0x330] sm:$0xff]
    %v282 = vld [vmem:[#allocation6 + $0x338] sm:$0xff]
    %v283 = vld [vmem:[#allocation6 + $0x340] sm:$0xff]
    %v284 = vld [vmem:[#allocation6 + $0x348] sm:$0xff]
    %v285 = vld [vmem:[#allocation6 + $0x350] sm:$0xff]
    %v286 = vld [vmem:[#allocation6 + $0x358] sm:$0xff]
    %v287 = vld [vmem:[#allocation6 + $0x360] sm:$0xff]
    %v288 = vld [vmem:[#allocation6 + $0x368] sm:$0xff]
    %v289 = vld [vmem:[#allocation6 + $0x370] sm:$0xff]
    %v290 = vld [vmem:[#allocation6 + $0x378] sm:$0xff]
    %v291 = vld [vmem:[#allocation6 + $0x380] sm:$0xff]
    %v292 = vld [vmem:[#allocation6 + $0x388] sm:$0xff]
    %v293 = vld [vmem:[#allocation6 + $0x390] sm:$0xff]
    %v294 = vld [vmem:[#allocation6 + $0x398] sm:$0xff]
    %v295 = vld [vmem:[#allocation6 + $0x3a0] sm:$0xff]
    %v296 = vld [vmem:[#allocation6 + $0x3a8] sm:$0xff]
    %v297 = vld [vmem:[#allocation6 + $0x3b0] sm:$0xff]
    %v298 = vld [vmem:[#allocation6 + $0x3b8] sm:$0xff]
    %v299 = vld [vmem:[#allocation6 + $0x3c0] sm:$0xff]
    %v300 = vld [vmem:[#allocation6 + $0x3c8] sm:$0xff]
    %v301 = vld [vmem:[#allocation6 + $0x3d0] sm:$0xff]
    %v302 = vld [vmem:[#allocation6 + $0x3d8] sm:$0xff]
    %v303 = vld [vmem:[#allocation6 + $0x3e0] sm:$0xff]
    %v304 = vld [vmem:[#allocation6 + $0x3e8] sm:$0xff]
    %v305 = vld [vmem:[#allocation6 + $0x3f0] sm:$0xff]
    %v306 = vld [vmem:[#allocation6 + $0x3f8] sm:$0xff]
    %v307 = vld [vmem:[#allocation6 + $0x400] sm:$0xff]
    %v308 = vld [vmem:[#allocation6 + $0x408] sm:$0xff]
    %v309 = vld [vmem:[#allocation6 + $0x410] sm:$0xff]
    %v310 = vld [vmem:[#allocation6 + $0x418] sm:$0xff]
    %v311 = vld [vmem:[#allocation6 + $0x420] sm:$0xff]
    %v312 = vld [vmem:[#allocation6 + $0x428] sm:$0xff]
    %v313 = vld [vmem:[#allocation6 + $0x430] sm:$0xff]
    %v314 = vld [vmem:[#allocation6 + $0x438] sm:$0xff]
    %v315 = vld [vmem:[#allocation6 + $0x440] sm:$0xff]
    %v316 = vld [vmem:[#allocation6 + $0x448] sm:$0xff]
    %v317 = vld [vmem:[#allocation6 + $0x450] sm:$0xff]
    %v318 = vld [vmem:[#allocation6 + $0x458] sm:$0xff]
    %v319 = vld [vmem:[#allocation6 + $0x460] sm:$0xff]
    %v320 = vld [vmem:[#allocation6 + $0x468] sm:$0xff]
    %v321 = vld [vmem:[#allocation6 + $0x470] sm:$0xff]
    %v322 = vld [vmem:[#allocation6 + $0x478] sm:$0xff]
    %v323 = vld [vmem:[#allocation6 + $0x480] sm:$0xff]
    %v324 = vld [vmem:[#allocation6 + $0x488] sm:$0xff]
    %v325 = vld [vmem:[#allocation6 + $0x490] sm:$0xff]
    %v326 = vld [vmem:[#allocation6 + $0x498] sm:$0xff]
    %v327 = vld [vmem:[#allocation6 + $0x4a0] sm:$0xff]
    %v328 = vld [vmem:[#allocation6 + $0x4a8] sm:$0xff]
    %v329 = vld [vmem:[#allocation6 + $0x4b0] sm:$0xff]
    %v330 = vld [vmem:[#allocation6 + $0x4b8] sm:$0xff]
    %v331 = vld [vmem:[#allocation6 + $0x4c0] sm:$0xff]
    %v332 = vld [vmem:[#allocation6 + $0x4c8] sm:$0xff]
    %v333 = vld [vmem:[#allocation6 + $0x4d0] sm:$0xff]
    %v334 = vld [vmem:[#allocation6 + $0x4d8] sm:$0xff]
    %v335 = vld [vmem:[#allocation6 + $0x4e0] sm:$0xff]
    %v336 = vld [vmem:[#allocation6 + $0x4e8] sm:$0xff]
    %v337 = vld [vmem:[#allocation6 + $0x4f0] sm:$0xff]
    %v338 = vld [vmem:[#allocation6 + $0x4f8] sm:$0xff]
    %v339 = vld [vmem:[#allocation6 + $0x500] sm:$0xff]
    %v340 = vld [vmem:[#allocation6 + $0x508] sm:$0xff]
    %v341 = vld [vmem:[#allocation6 + $0x510] sm:$0xff]
    %v342 = vld [vmem:[#allocation6 + $0x518] sm:$0xff]
    %v343 = vld [vmem:[#allocation6 + $0x520] sm:$0xff]
    %v344 = vld [vmem:[#allocation6 + $0x528] sm:$0xff]
    %v345 = vld [vmem:[#allocation6 + $0x530] sm:$0xff]
    %v346 = vld [vmem:[#allocation6 + $0x538] sm:$0xff]
    %v347 = vld [vmem:[#allocation6 + $0x540] sm:$0xff]
    %v348 = vld [vmem:[#allocation6 + $0x548] sm:$0xff]
    %v349 = vld [vmem:[#allocation6 + $0x550] sm:$0xff]
    %v350 = vld [vmem:[#allocation6 + $0x558] sm:$0xff]
    %v351 = vld [vmem:[#allocation6 + $0x560] sm:$0xff]
    %v352 = vld [vmem:[#allocation6 + $0x568] sm:$0xff]
    %v353 = vld [vmem:[#allocation6 + $0x570] sm:$0xff]
    %v354 = vld [vmem:[#allocation6 + $0x578] sm:$0xff]
    %v355 = vld [vmem:[#allocation6 + $0x580] sm:$0xff]
    %v356 = vld [vmem:[#allocation6 + $0x588] sm:$0xff]
    %v357 = vld [vmem:[#allocation6 + $0x590] sm:$0xff]
    %v358 = vld [vmem:[#allocation6 + $0x598] sm:$0xff]
    %v359 = vld [vmem:[#allocation6 + $0x5a0] sm:$0xff]
    %v360 = vld [vmem:[#allocation6 + $0x5a8] sm:$0xff]
    %v361 = vld [vmem:[#allocation6 + $0x5b0] sm:$0xff]
    %v362 = vld [vmem:[#allocation6 + $0x5b8] sm:$0xff]
    %v363 = vld [vmem:[#allocation6 + $0x5c0] sm:$0xff]
    %v364 = vld [vmem:[#allocation6 + $0x5c8] sm:$0xff]
    %v365 = vld [vmem:[#allocation6 + $0x5d0] sm:$0xff]
    %v366 = vld [vmem:[#allocation6 + $0x5d8] sm:$0xff]
    %v367 = vld [vmem:[#allocation6 + $0x5e0] sm:$0xff]
    %v368 = vld [vmem:[#allocation6 + $0x5e8] sm:$0xff]
    %v369 = vld [vmem:[#allocation6 + $0x5f0] sm:$0xff]
    %v370 = vld [vmem:[#allocation6 + $0x5f8] sm:$0xff]
    %v371 = vld [vmem:[#allocation6 + $0x600] sm:$0xff]
    %v372 = vld [vmem:[#allocation6 + $0x608] sm:$0xff]
    %v373 = vld [vmem:[#allocation6 + $0x610] sm:$0xff]
    %v374 = vld [vmem:[#allocation6 + $0x618] sm:$0xff]
    %v375 = vld [vmem:[#allocation6 + $0x620] sm:$0xff]
    %v376 = vld [vmem:[#allocation6 + $0x628] sm:$0xff]
    %v377 = vld [vmem:[#allocation6 + $0x630] sm:$0xff]
    %v378 = vld [vmem:[#allocation6 + $0x638] sm:$0xff]
    %v379 = vld [vmem:[#allocation6 + $0x640] sm:$0xff]
    %v380 = vld [vmem:[#allocation6 + $0x648] sm:$0xff]
    %v381 = vld [vmem:[#allocation6 + $0x650] sm:$0xff]
    %v382 = vld [vmem:[#allocation6 + $0x658] sm:$0xff]
    %v383 = vld [vmem:[#allocation6 + $0x660] sm:$0xff]
    %v384 = vld [vmem:[#allocation6 + $0x668] sm:$0xff]
    %v385 = vld [vmem:[#allocation6 + $0x670] sm:$0xff]
    %v386 = vld [vmem:[#allocation6 + $0x678] sm:$0xff]
    %v387 = vld [vmem:[#allocation6 + $0x680] sm:$0xff]
    %v388 = vld [vmem:[#allocation6 + $0x688] sm:$0xff]
    %v389 = vld [vmem:[#allocation6 + $0x690] sm:$0xff]
    %v390 = vld [vmem:[#allocation6 + $0x698] sm:$0xff]
    %v391 = vld [vmem:[#allocation6 + $0x6a0] sm:$0xff]
    %v392 = vld [vmem:[#allocation6 + $0x6a8] sm:$0xff]
    %v393 = vld [vmem:[#allocation6 + $0x6b0] sm:$0xff]
    %v394 = vld [vmem:[#allocation6 + $0x6b8] sm:$0xff]
    %v395 = vld [vmem:[#allocation6 + $0x6c0] sm:$0xff]
    %v396 = vld [vmem:[#allocation6 + $0x6c8] sm:$0xff]
    %v397 = vld [vmem:[#allocation6 + $0x6d0] sm:$0xff]
    %v398 = vld [vmem:[#allocation6 + $0x6d8] sm:$0xff]
    %v399 = vld [vmem:[#allocation6 + $0x6e0] sm:$0xff]
    %v400 = vld [vmem:[#allocation6 + $0x6e8] sm:$0xff]
    %v401 = vld [vmem:[#allocation6 + $0x6f0] sm:$0xff]
    %v402 = vld [vmem:[#allocation6 + $0x6f8] sm:$0xff]
    %v403 = vld [vmem:[#allocation6 + $0x700] sm:$0xff]
    %v404 = vld [vmem:[#allocation6 + $0x708] sm:$0xff]
    %v405 = vld [vmem:[#allocation6 + $0x710] sm:$0xff]
    %v406 = vld [vmem:[#allocation6 + $0x718] sm:$0xff]
    %v407 = vld [vmem:[#allocation6 + $0x720] sm:$0xff]
    %v408 = vld [vmem:[#allocation6 + $0x728] sm:$0xff]
    %v409 = vld [vmem:[#allocation6 + $0x730] sm:$0xff]
    %v410 = vld [vmem:[#allocation6 + $0x738] sm:$0xff]
    %v411 = vld [vmem:[#allocation6 + $0x740] sm:$0xff]
    %v412 = vld [vmem:[#allocation6 + $0x748] sm:$0xff]
    %v413 = vld [vmem:[#allocation6 + $0x750] sm:$0xff]
    %v414 = vld [vmem:[#allocation6 + $0x758] sm:$0xff]
    %v415 = vld [vmem:[#allocation6 + $0x760] sm:$0xff]
    %v416 = vld [vmem:[#allocation6 + $0x768] sm:$0xff]
    %v417 = vld [vmem:[#allocation6 + $0x770] sm:$0xff]
    %v418 = vld [vmem:[#allocation6 + $0x778] sm:$0xff]
    %v419 = vld [vmem:[#allocation6 + $0x780] sm:$0xff]
    %v420 = vld [vmem:[#allocation6 + $0x788] sm:$0xff]
    %v421 = vld [vmem:[#allocation6 + $0x790] sm:$0xff]
    %v422 = vld [vmem:[#allocation6 + $0x798] sm:$0xff]
    %v423 = vld [vmem:[#allocation6 + $0x7a0] sm:$0xff]
    %v424 = vld [vmem:[#allocation6 + $0x7a8] sm:$0xff]
    %v425 = vld [vmem:[#allocation6 + $0x7b0] sm:$0xff]
    %v426 = vld [vmem:[#allocation6 + $0x7b8] sm:$0xff]
    %v427 = vld [vmem:[#allocation6 + $0x7c0] sm:$0xff]
    %v428 = vld [vmem:[#allocation6 + $0x7c8] sm:$0xff]
    %v429 = vld [vmem:[#allocation6 + $0x7d0] sm:$0xff]
    %v430 = vld [vmem:[#allocation6 + $0x7d8] sm:$0xff]
    %v431 = vld [vmem:[#allocation6 + $0x7e0] sm:$0xff]
    %v432 = vld [vmem:[#allocation6 + $0x7e8] sm:$0xff]
    %v433 = vld [vmem:[#allocation6 + $0x7f0] sm:$0xff]
    %v434 = vld [vmem:[#allocation6 + $0x7f8] sm:$0xff]
    %v435 = vld [vmem:[#allocation6 + $0x800] sm:$0xff]
    %v436 = vld [vmem:[#allocation6 + $0x808] sm:$0xff]
    %v437 = vld [vmem:[#allocation6 + $0x810] sm:$0xff]
    %v438 = vld [vmem:[#allocation6 + $0x818] sm:$0xff]
    %v439 = vld [vmem:[#allocation6 + $0x820] sm:$0xff]
    %v440 = vld [vmem:[#allocation6 + $0x828] sm:$0xff]
    %v441 = vld [vmem:[#allocation6 + $0x830] sm:$0xff]
    %v442 = vld [vmem:[#allocation6 + $0x838] sm:$0xff]
    %v443 = vld [vmem:[#allocation6 + $0x840] sm:$0xff]
    %v444 = vld [vmem:[#allocation6 + $0x848] sm:$0xff]
    %v445 = vld [vmem:[#allocation6 + $0x850] sm:$0xff]
    %v446 = vld [vmem:[#allocation6 + $0x858] sm:$0xff]
    %v447 = vld [vmem:[#allocation6 + $0x860] sm:$0xff]
    %v448 = vld [vmem:[#allocation6 + $0x868] sm:$0xff]
    %v449 = vld [vmem:[#allocation6 + $0x870] sm:$0xff]
    %v450 = vld [vmem:[#allocation6 + $0x878] sm:$0xff]
    %v451 = vld [vmem:[#allocation6 + $0x880] sm:$0xff]
    %v452 = vld [vmem:[#allocation6 + $0x888] sm:$0xff]
    %v453 = vld [vmem:[#allocation6 + $0x890] sm:$0xff]
    %v454 = vld [vmem:[#allocation6 + $0x898] sm:$0xff]
    %v455 = vld [vmem:[#allocation6 + $0x8a0] sm:$0xff]
    %v456 = vld [vmem:[#allocation6 + $0x8a8] sm:$0xff]
    %v457 = vld [vmem:[#allocation6 + $0x8b0] sm:$0xff]
    %v458 = vld [vmem:[#allocation6 + $0x8b8] sm:$0xff]
    %v459 = vld [vmem:[#allocation6 + $0x8c0] sm:$0xff]
    %v460 = vld [vmem:[#allocation6 + $0x8c8] sm:$0xff]
    %v461 = vld [vmem:[#allocation6 + $0x8d0] sm:$0xff]
    %v462 = vld [vmem:[#allocation6 + $0x8d8] sm:$0xff]
    %v463 = vld [vmem:[#allocation6 + $0x8e0] sm:$0xff]
    %v464 = vld [vmem:[#allocation6 + $0x8e8] sm:$0xff]
    %v465 = vld [vmem:[#allocation6 + $0x8f0] sm:$0xff]
    %v466 = vld [vmem:[#allocation6 + $0x8f8] sm:$0xff]
    %v467 = vld [vmem:[#allocation6 + $0x900] sm:$0xff]
    %v468 = vld [vmem:[#allocation6 + $0x908] sm:$0xff]
    %v469 = vld [vmem:[#allocation6 + $0x910] sm:$0xff]
    %v470 = vld [vmem:[#allocation6 + $0x918] sm:$0xff]
    %v471 = vld [vmem:[#allocation6 + $0x920] sm:$0xff]
    %v472 = vld [vmem:[#allocation6 + $0x928] sm:$0xff]
    %v473 = vld [vmem:[#allocation6 + $0x930] sm:$0xff]
    %v474 = vld [vmem:[#allocation6 + $0x938] sm:$0xff]
    %v475 = vld [vmem:[#allocation6 + $0x940] sm:$0xff]
    %v476 = vld [vmem:[#allocation6 + $0x948] sm:$0xff]
    %v477 = vld [vmem:[#allocation6 + $0x950] sm:$0xff]
    %v478 = vld [vmem:[#allocation6 + $0x958] sm:$0xff]
    %v479 = vld [vmem:[#allocation6 + $0x960] sm:$0xff]
    %v480 = vld [vmem:[#allocation6 + $0x968] sm:$0xff]
    %v481 = vld [vmem:[#allocation6 + $0x970] sm:$0xff]
    %v482 = vld [vmem:[#allocation6 + $0x978] sm:$0xff]
    %v483 = vld [vmem:[#allocation6 + $0x980] sm:$0xff]
    %v484 = vld [vmem:[#allocation6 + $0x988] sm:$0xff]
    %v485 = vld [vmem:[#allocation6 + $0x990] sm:$0xff]
    %v486 = vld [vmem:[#allocation6 + $0x998] sm:$0xff]
    %v487 = vld [vmem:[#allocation6 + $0x9a0] sm:$0xff]
    %v488 = vld [vmem:[#allocation6 + $0x9a8] sm:$0xff]
    %v489 = vld [vmem:[#allocation6 + $0x9b0] sm:$0xff]
    %v490 = vld [vmem:[#allocation6 + $0x9b8] sm:$0xff]
    %v491 = vld [vmem:[#allocation6 + $0x9c0] sm:$0xff]
    %v492 = vld [vmem:[#allocation6 + $0x9c8] sm:$0xff]
    %v493 = vld [vmem:[#allocation6 + $0x9d0] sm:$0xff]
    %v494 = vld [vmem:[#allocation6 + $0x9d8] sm:$0xff]
    %v495 = vld [vmem:[#allocation6 + $0x9e0] sm:$0xff]
    %v496 = vld [vmem:[#allocation6 + $0x9e8] sm:$0xff]
    %v497 = vld [vmem:[#allocation6 + $0x9f0] sm:$0xff]
    %v498 = vld [vmem:[#allocation6 + $0x9f8] sm:$0xff]
    %v499 = vld [vmem:[#allocation6 + $0xa00] sm:$0xff]
    %v500 = vld [vmem:[#allocation6 + $0xa08] sm:$0xff]
    %v501 = vld [vmem:[#allocation6 + $0xa10] sm:$0xff]
    %v502 = vld [vmem:[#allocation6 + $0xa18] sm:$0xff]
    %v503 = vld [vmem:[#allocation6 + $0xa20] sm:$0xff]
    %v504 = vld [vmem:[#allocation6 + $0xa28] sm:$0xff]
    %v505 = vld [vmem:[#allocation6 + $0xa30] sm:$0xff]
    %v506 = vld [vmem:[#allocation6 + $0xa38] sm:$0xff]
    %v507 = vld [vmem:[#allocation6 + $0xa40] sm:$0xff]
    %v508 = vld [vmem:[#allocation6 + $0xa48] sm:$0xff]
    %v509 = vld [vmem:[#allocation6 + $0xa50] sm:$0xff]
    %v510 = vld [vmem:[#allocation6 + $0xa58] sm:$0xff]
    %v511 = vld [vmem:[#allocation6 + $0xa60] sm:$0xff]
    %v512 = vld [vmem:[#allocation6 + $0xa68] sm:$0xff]
    %v513 = vld [vmem:[#allocation6 + $0xa70] sm:$0xff]
    %v514 = vld [vmem:[#allocation6 + $0xa78] sm:$0xff]
    %v515 = vld [vmem:[#allocation6 + $0xa80] sm:$0xff]
    %v516 = vld [vmem:[#allocation6 + $0xa88] sm:$0xff]
    %v517 = vld [vmem:[#allocation6 + $0xa90] sm:$0xff]
    %v518 = vld [vmem:[#allocation6 + $0xa98] sm:$0xff]
    %v519 = vld [vmem:[#allocation6 + $0xaa0] sm:$0xff]
    %v520 = vld [vmem:[#allocation6 + $0xaa8] sm:$0xff]
    %v521 = vld [vmem:[#allocation6 + $0xab0] sm:$0xff]
    %v522 = vld [vmem:[#allocation6 + $0xab8] sm:$0xff]
    %v523 = vld [vmem:[#allocation6 + $0xac0] sm:$0xff]
    %v524 = vld [vmem:[#allocation6 + $0xac8] sm:$0xff]
    %v525 = vld [vmem:[#allocation6 + $0xad0] sm:$0xff]
    %v526 = vld [vmem:[#allocation6 + $0xad8] sm:$0xff]
    %v527 = vld [vmem:[#allocation6 + $0xae0] sm:$0xff]
    %v528 = vld [vmem:[#allocation6 + $0xae8] sm:$0xff]
    %v529 = vld [vmem:[#allocation6 + $0xaf0] sm:$0xff]
    %v530 = vld [vmem:[#allocation6 + $0xaf8] sm:$0xff]
    %v531 = vld [vmem:[#allocation6 + $0xb00] sm:$0xff]
    %v532 = vld [vmem:[#allocation6 + $0xb08] sm:$0xff]
    %v533 = vld [vmem:[#allocation6 + $0xb10] sm:$0xff]
    %v534 = vld [vmem:[#allocation6 + $0xb18] sm:$0xff]
    %v535 = vld [vmem:[#allocation6 + $0xb20] sm:$0xff]
    %v536 = vld [vmem:[#allocation6 + $0xb28] sm:$0xff]
    %v537 = vld [vmem:[#allocation6 + $0xb30] sm:$0xff]
    %v538 = vld [vmem:[#allocation6 + $0xb38] sm:$0xff]
    %v539 = vld [vmem:[#allocation6 + $0xb40] sm:$0xff]
    %v540 = vld [vmem:[#allocation6 + $0xb48] sm:$0xff]
    %v541 = vld [vmem:[#allocation6 + $0xb50] sm:$0xff]
    %v542 = vld [vmem:[#allocation6 + $0xb58] sm:$0xff]
    %v543 = vld [vmem:[#allocation6 + $0xb60] sm:$0xff]
    %v544 = vld [vmem:[#allocation6 + $0xb68] sm:$0xff]
    %v545 = vld [vmem:[#allocation6 + $0xb70] sm:$0xff]
    %v546 = vld [vmem:[#allocation6 + $0xb78] sm:$0xff]
    %v547 = vld [vmem:[#allocation6 + $0xb80] sm:$0xff]
    %v548 = vld [vmem:[#allocation6 + $0xb88] sm:$0xff]
    %v549 = vld [vmem:[#allocation6 + $0xb90] sm:$0xff]
    %v550 = vld [vmem:[#allocation6 + $0xb98] sm:$0xff]
    %v551 = vld [vmem:[#allocation6 + $0xba0] sm:$0xff]
    %v552 = vld [vmem:[#allocation6 + $0xba8] sm:$0xff]
    %v553 = vld [vmem:[#allocation6 + $0xbb0] sm:$0xff]
    %v554 = vld [vmem:[#allocation6 + $0xbb8] sm:$0xff]
    %v555 = vld [vmem:[#allocation6 + $0xbc0] sm:$0xff]
    %v556 = vld [vmem:[#allocation6 + $0xbc8] sm:$0xff]
    %v557 = vld [vmem:[#allocation6 + $0xbd0] sm:$0xff]
    %v558 = vld [vmem:[#allocation6 + $0xbd8] sm:$0xff]
    %v559 = vld [vmem:[#allocation6 + $0xbe0] sm:$0xff]
    %v560 = vld [vmem:[#allocation6 + $0xbe8] sm:$0xff]
    %v561 = vld [vmem:[#allocation6 + $0xbf0] sm:$0xff]
    %v562 = vld [vmem:[#allocation6 + $0xbf8] sm:$0xff]
    %v563 = vld [vmem:[#allocation6 + $0xc00] sm:$0xff]
    %v564 = vld [vmem:[#allocation6 + $0xc08] sm:$0xff]
    %v565 = vld [vmem:[#allocation6 + $0xc10] sm:$0xff]
    %v566 = vld [vmem:[#allocation6 + $0xc18] sm:$0xff]
    %v567 = vld [vmem:[#allocation6 + $0xc20] sm:$0xff]
    %v568 = vld [vmem:[#allocation6 + $0xc28] sm:$0xff]
    %v569 = vld [vmem:[#allocation6 + $0xc30] sm:$0xff]
    %v570 = vld [vmem:[#allocation6 + $0xc38] sm:$0xff]
    %v571 = vld [vmem:[#allocation6 + $0xc40] sm:$0xff]
    %v572 = vld [vmem:[#allocation6 + $0xc48] sm:$0xff]
    %v573 = vld [vmem:[#allocation6 + $0xc50] sm:$0xff]
    %v574 = vld [vmem:[#allocation6 + $0xc58] sm:$0xff]
    %v575 = vld [vmem:[#allocation6 + $0xc60] sm:$0xff]
    %v576 = vld [vmem:[#allocation6 + $0xc68] sm:$0xff]
    %v577 = vld [vmem:[#allocation6 + $0xc70] sm:$0xff]
    %v578 = vld [vmem:[#allocation6 + $0xc78] sm:$0xff]
    %v579 = vld [vmem:[#allocation6 + $0xc80] sm:$0xff]
    %v580 = vld [vmem:[#allocation6 + $0xc88] sm:$0xff]
    %v581 = vld [vmem:[#allocation6 + $0xc90] sm:$0xff]
    %v582 = vld [vmem:[#allocation6 + $0xc98] sm:$0xff]
    %v583 = vld [vmem:[#allocation6 + $0xca0] sm:$0xff]
    %v584 = vld [vmem:[#allocation6 + $0xca8] sm:$0xff]
    %v585 = vld [vmem:[#allocation6 + $0xcb0] sm:$0xff]
    %v586 = vld [vmem:[#allocation6 + $0xcb8] sm:$0xff]
    %v587 = vld [vmem:[#allocation6 + $0xcc0] sm:$0xff]
    %v588 = vld [vmem:[#allocation6 + $0xcc8] sm:$0xff]
    %v589 = vld [vmem:[#allocation6 + $0xcd0] sm:$0xff]
    %v590 = vld [vmem:[#allocation6 + $0xcd8] sm:$0xff]
    %v591 = vld [vmem:[#allocation6 + $0xce0] sm:$0xff]
    %v592 = vld [vmem:[#allocation6 + $0xce8] sm:$0xff]
    %v593 = vld [vmem:[#allocation6 + $0xcf0] sm:$0xff]
    %v594 = vld [vmem:[#allocation6 + $0xcf8] sm:$0xff]
    %v595 = vld [vmem:[#allocation7] sm:$0x3]
    %v597 = vlaneseq
    %v598 = vshrl.u32 %v597, 7
    %v599 = vsub.s32 0, %v598
    %v600 = vrot.slane %v595, %v599
    %v601 = vlaneseq
    %v602 = vshrl.u32 %v601, 7
    %v603 = vsub.s32 1, %v602
    %v604 = vrot.slane %v595, %v603
    %607 = vmatprep.subr.mxu0 %v210
    %608 = vmatpush1.msra.mxu0 %v209
    %609 = vmatprep.subr.mxu0 %v208
    %610 = vmatpush1.msra.mxu0 %v207
    %611 = vmatprep.subr.mxu0 %v206
    %612 = vmatpush1.msra.mxu0 %v205
    %613 = vmatprep.subr.mxu0 %v204
    %614 = vmatpush1.msra.mxu0 %v203
    %615 = vmatprep.subr.mxu0 %v202
    %616 = vmatpush1.msra.mxu0 %v201
    %617 = vmatprep.subr.mxu0 %v200
    %618 = vmatpush1.msra.mxu0 %v199
    %619 = vmatprep.subr.mxu0 %v198
    %620 = vmatpush1.msra.mxu0 %v197
    %621 = vmatprep.subr.mxu0 %v196
    %622 = vmatpush1.msra.mxu0 %v195
    %623 = vmatprep.subr.mxu0 %v194
    %624 = vmatpush1.msra.mxu0 %v193
    %625 = vmatprep.subr.mxu0 %v192
    %626 = vmatpush1.msra.mxu0 %v191
    %627 = vmatprep.subr.mxu0 %v190
    %628 = vmatpush1.msra.mxu0 %v189
    %629 = vmatprep.subr.mxu0 %v188
    %630 = vmatpush1.msra.mxu0 %v187
    %631 = vmatprep.subr.mxu0 %v186
    %632 = vmatpush1.msra.mxu0 %v185
    %633 = vmatprep.subr.mxu0 %v184
    %634 = vmatpush1.msra.mxu0 %v183
    %635 = vmatprep.subr.mxu0 %v182
    %636 = vmatpush1.msra.mxu0 %v181
    %637 = vmatprep.subr.mxu0 %v180
    %638 = vmatpush1.msra.mxu0 %v179
    %639 = vmatprep.subr.mxu0 %v242
    %640 = vmatpush2.msra.mxu0 %v241
    %641 = vmatprep.subr.mxu0 %v240
    %642 = vmatpush2.msra.mxu0 %v239
    %643 = vmatprep.subr.mxu0 %v238
    %644 = vmatpush2.msra.mxu0 %v237
    %645 = vmatprep.subr.mxu0 %v236
    %646 = vmatpush2.msra.mxu0 %v235
    %647 = vmatprep.subr.mxu0 %v234
    %648 = vmatpush2.msra.mxu0 %v233
    %649 = vmatprep.subr.mxu0 %v232
    %650 = vmatpush2.msra.mxu0 %v231
    %651 = vmatprep.subr.mxu0 %v230
    %652 = vmatpush2.msra.mxu0 %v229
    %653 = vmatprep.subr.mxu0 %v228
    %654 = vmatpush2.msra.mxu0 %v227
    %655 = vmatprep.subr.mxu0 %v226
    %656 = vmatpush2.msra.mxu0 %v225
    %657 = vmatprep.subr.mxu0 %v224
    %658 = vmatpush2.msra.mxu0 %v223
    %659 = vmatprep.subr.mxu0 %v222
    %660 = vmatpush2.msra.mxu0 %v221
    %661 = vmatprep.subr.mxu0 %v220
    %662 = vmatpush2.msra.mxu0 %v219
    %663 = vmatprep.subr.mxu0 %v218
    %664 = vmatpush2.msra.mxu0 %v217
    %665 = vmatprep.subr.mxu0 %v216
    %666 = vmatpush2.msra.mxu0 %v215
    %667 = vmatprep.subr.mxu0 %v214
    %668 = vmatpush2.msra.mxu0 %v213
    %669 = vmatprep.subr.mxu0 %v212
    %670 = vmatpush2.msra.mxu0 %v211
    %671 = vmatprep.mubr.f32.mxu0 %v167
    %672 = vmatmul.mubr.f32.gmra.mxu0 %v166
    %v673 = vpop.f32.mrf.mxu0
    %v674 = vadd.f32 %v600, %v673
    %v675 = vpop.f32.mrf.mxu0
    %v676 = vadd.f32 %v604, %v675
    %677 = vdwg.mxu0
    %678 = vmatprep.subr.mxu0 %v274
    %679 = vmatpush1.msra.mxu0 %v273
    %680 = vmatprep.subr.mxu0 %v272
    %681 = vmatpush1.msra.mxu0 %v271
    %682 = vmatprep.subr.mxu0 %v270
    %683 = vmatpush1.msra.mxu0 %v269
    %684 = vmatprep.subr.mxu0 %v268
    %685 = vmatpush1.msra.mxu0 %v267
    %686 = vmatprep.subr.mxu0 %v266
    %687 = vmatpush1.msra.mxu0 %v265
    %688 = vmatprep.subr.mxu0 %v264
    %689 = vmatpush1.msra.mxu0 %v263
    %690 = vmatprep.subr.mxu0 %v262
    %691 = vmatpush1.msra.mxu0 %v261
    %692 = vmatprep.subr.mxu0 %v260
    %693 = vmatpush1.msra.mxu0 %v259
    %694 = vmatprep.subr.mxu0 %v258
    %695 = vmatpush1.msra.mxu0 %v257
    %696 = vmatprep.subr.mxu0 %v256
    %697 = vmatpush1.msra.mxu0 %v255
    %698 = vmatprep.subr.mxu0 %v254
    %699 = vmatpush1.msra.mxu0 %v253
    %700 = vmatprep.subr.mxu0 %v252
    %701 = vmatpush1.msra.mxu0 %v251
    %702 = vmatprep.subr.mxu0 %v250
    %703 = vmatpush1.msra.mxu0 %v249
    %704 = vmatprep.subr.mxu0 %v248
    %705 = vmatpush1.msra.mxu0 %v247
    %706 = vmatprep.subr.mxu0 %v246
    %707 = vmatpush1.msra.mxu0 %v245
    %708 = vmatprep.subr.mxu0 %v244
    %709 = vmatpush1.msra.mxu0 %v243
    %710 = vmatprep.subr.mxu0 %v306
    %711 = vmatpush2.msra.mxu0 %v305
    %712 = vmatprep.subr.mxu0 %v304
    %713 = vmatpush2.msra.mxu0 %v303
    %714 = vmatprep.subr.mxu0 %v302
    %715 = vmatpush2.msra.mxu0 %v301
    %716 = vmatprep.subr.mxu0 %v300
    %717 = vmatpush2.msra.mxu0 %v299
    %718 = vmatprep.subr.mxu0 %v298
    %719 = vmatpush2.msra.mxu0 %v297
    %720 = vmatprep.subr.mxu0 %v296
    %721 = vmatpush2.msra.mxu0 %v295
    %722 = vmatprep.subr.mxu0 %v294
    %723 = vmatpush2.msra.mxu0 %v293
    %724 = vmatprep.subr.mxu0 %v292
    %725 = vmatpush2.msra.mxu0 %v291
    %726 = vmatprep.subr.mxu0 %v290
    %727 = vmatpush2.msra.mxu0 %v289
    %728 = vmatprep.subr.mxu0 %v288
    %729 = vmatpush2.msra.mxu0 %v287
    %730 = vmatprep.subr.mxu0 %v286
    %731 = vmatpush2.msra.mxu0 %v285
    %732 = vmatprep.subr.mxu0 %v284
    %733 = vmatpush2.msra.mxu0 %v283
    %734 = vmatprep.subr.mxu0 %v282
    %735 = vmatpush2.msra.mxu0 %v281
    %736 = vmatprep.subr.mxu0 %v280
    %737 = vmatpush2.msra.mxu0 %v279
    %738 = vmatprep.subr.mxu0 %v278
    %739 = vmatpush2.msra.mxu0 %v277
    %740 = vmatprep.subr.mxu0 %v276
    %741 = vmatpush2.msra.mxu0 %v275
    %742 = vmatprep.mubr.f32.mxu0 %v169
    %743 = vmatmul.mubr.f32.gmra.mxu0 %v168
    %v744 = vpop.f32.mrf.mxu0
    %v745 = vadd.f32 %v674, %v744
    %v746 = vpop.f32.mrf.mxu0
    %v747 = vadd.f32 %v676, %v746
    %748 = vdwg.mxu0
    %749 = vmatprep.subr.mxu0 %v338
    %750 = vmatpush1.msra.mxu0 %v337
    %751 = vmatprep.subr.mxu0 %v336
    %752 = vmatpush1.msra.mxu0 %v335
    %753 = vmatprep.subr.mxu0 %v334
    %754 = vmatpush1.msra.mxu0 %v333
    %755 = vmatprep.subr.mxu0 %v332
    %756 = vmatpush1.msra.mxu0 %v331
    %757 = vmatprep.subr.mxu0 %v330
    %758 = vmatpush1.msra.mxu0 %v329
    %759 = vmatprep.subr.mxu0 %v328
    %760 = vmatpush1.msra.mxu0 %v327
    %761 = vmatprep.subr.mxu0 %v326
    %762 = vmatpush1.msra.mxu0 %v325
    %763 = vmatprep.subr.mxu0 %v324
    %764 = vmatpush1.msra.mxu0 %v323
    %765 = vmatprep.subr.mxu0 %v322
    %766 = vmatpush1.msra.mxu0 %v321
    %767 = vmatprep.subr.mxu0 %v320
    %768 = vmatpush1.msra.mxu0 %v319
    %769 = vmatprep.subr.mxu0 %v318
    %770 = vmatpush1.msra.mxu0 %v317
    %771 = vmatprep.subr.mxu0 %v316
    %772 = vmatpush1.msra.mxu0 %v315
    %773 = vmatprep.subr.mxu0 %v314
    %774 = vmatpush1.msra.mxu0 %v313
    %775 = vmatprep.subr.mxu0 %v312
    %776 = vmatpush1.msra.mxu0 %v311
    %777 = vmatprep.subr.mxu0 %v310
    %778 = vmatpush1.msra.mxu0 %v309
    %779 = vmatprep.subr.mxu0 %v308
    %780 = vmatpush1.msra.mxu0 %v307
    %781 = vmatprep.subr.mxu0 %v370
    %782 = vmatpush2.msra.mxu0 %v369
    %783 = vmatprep.subr.mxu0 %v368
    %784 = vmatpush2.msra.mxu0 %v367
    %785 = vmatprep.subr.mxu0 %v366
    %786 = vmatpush2.msra.mxu0 %v365
    %787 = vmatprep.subr.mxu0 %v364
    %788 = vmatpush2.msra.mxu0 %v363
    %789 = vmatprep.subr.mxu0 %v362
    %790 = vmatpush2.msra.mxu0 %v361
    %791 = vmatprep.subr.mxu0 %v360
    %792 = vmatpush2.msra.mxu0 %v359
    %793 = vmatprep.subr.mxu0 %v358
    %794 = vmatpush2.msra.mxu0 %v357
    %795 = vmatprep.subr.mxu0 %v356
    %796 = vmatpush2.msra.mxu0 %v355
    %797 = vmatprep.subr.mxu0 %v354
    %798 = vmatpush2.msra.mxu0 %v353
    %799 = vmatprep.subr.mxu0 %v352
    %800 = vmatpush2.msra.mxu0 %v351
    %801 = vmatprep.subr.mxu0 %v350
    %802 = vmatpush2.msra.mxu0 %v349
    %803 = vmatprep.subr.mxu0 %v348
    %804 = vmatpush2.msra.mxu0 %v347
    %805 = vmatprep.subr.mxu0 %v346
    %806 = vmatpush2.msra.mxu0 %v345
    %807 = vmatprep.subr.mxu0 %v344
    %808 = vmatpush2.msra.mxu0 %v343
    %809 = vmatprep.subr.mxu0 %v342
    %810 = vmatpush2.msra.mxu0 %v341
    %811 = vmatprep.subr.mxu0 %v340
    %812 = vmatpush2.msra.mxu0 %v339
    %813 = vmatprep.mubr.f32.mxu0 %v171
    %814 = vmatmul.mubr.f32.gmra.mxu0 %v170
    %v815 = vpop.f32.mrf.mxu0
    %v816 = vadd.f32 %v745, %v815
    %v817 = vpop.f32.mrf.mxu0
    %v818 = vadd.f32 %v747, %v817
    %819 = vdwg.mxu0
    %820 = vmatprep.subr.mxu0 %v402
    %821 = vmatpush1.msra.mxu0 %v401
    %822 = vmatprep.subr.mxu0 %v400
    %823 = vmatpush1.msra.mxu0 %v399
    %824 = vmatprep.subr.mxu0 %v398
    %825 = vmatpush1.msra.mxu0 %v397
    %826 = vmatprep.subr.mxu0 %v396
    %827 = vmatpush1.msra.mxu0 %v395
    %828 = vmatprep.subr.mxu0 %v394
    %829 = vmatpush1.msra.mxu0 %v393
    %830 = vmatprep.subr.mxu0 %v392
    %831 = vmatpush1.msra.mxu0 %v391
    %832 = vmatprep.subr.mxu0 %v390
    %833 = vmatpush1.msra.mxu0 %v389
    %834 = vmatprep.subr.mxu0 %v388
    %835 = vmatpush1.msra.mxu0 %v387
    %836 = vmatprep.subr.mxu0 %v386
    %837 = vmatpush1.msra.mxu0 %v385
    %838 = vmatprep.subr.mxu0 %v384
    %839 = vmatpush1.msra.mxu0 %v383
    %840 = vmatprep.subr.mxu0 %v382
    %841 = vmatpush1.msra.mxu0 %v381
    %842 = vmatprep.subr.mxu0 %v380
    %843 = vmatpush1.msra.mxu0 %v379
    %844 = vmatprep.subr.mxu0 %v378
    %845 = vmatpush1.msra.mxu0 %v377
    %846 = vmatprep.subr.mxu0 %v376
    %847 = vmatpush1.msra.mxu0 %v375
    %848 = vmatprep.subr.mxu0 %v374
    %849 = vmatpush1.msra.mxu0 %v373
    %850 = vmatprep.subr.mxu0 %v372
    %851 = vmatpush1.msra.mxu0 %v371
    %852 = vmatprep.subr.mxu0 %v434
    %853 = vmatpush2.msra.mxu0 %v433
    %854 = vmatprep.subr.mxu0 %v432
    %855 = vmatpush2.msra.mxu0 %v431
    %856 = vmatprep.subr.mxu0 %v430
    %857 = vmatpush2.msra.mxu0 %v429
    %858 = vmatprep.subr.mxu0 %v428
    %859 = vmatpush2.msra.mxu0 %v427
    %860 = vmatprep.subr.mxu0 %v426
    %861 = vmatpush2.msra.mxu0 %v425
    %862 = vmatprep.subr.mxu0 %v424
    %863 = vmatpush2.msra.mxu0 %v423
    %864 = vmatprep.subr.mxu0 %v422
    %865 = vmatpush2.msra.mxu0 %v421
    %866 = vmatprep.subr.mxu0 %v420
    %867 = vmatpush2.msra.mxu0 %v419
    %868 = vmatprep.subr.mxu0 %v418
    %869 = vmatpush2.msra.mxu0 %v417
    %870 = vmatprep.subr.mxu0 %v416
    %871 = vmatpush2.msra.mxu0 %v415
    %872 = vmatprep.subr.mxu0 %v414
    %873 = vmatpush2.msra.mxu0 %v413
    %874 = vmatprep.subr.mxu0 %v412
    %875 = vmatpush2.msra.mxu0 %v411
    %876 = vmatprep.subr.mxu0 %v410
    %877 = vmatpush2.msra.mxu0 %v409
    %878 = vmatprep.subr.mxu0 %v408
    %879 = vmatpush2.msra.mxu0 %v407
    %880 = vmatprep.subr.mxu0 %v406
    %881 = vmatpush2.msra.mxu0 %v405
    %882 = vmatprep.subr.mxu0 %v404
    %883 = vmatpush2.msra.mxu0 %v403
    %884 = vmatprep.mubr.f32.mxu0 %v173
    %885 = vmatmul.mubr.f32.gmra.mxu0 %v172
    %v886 = vpop.f32.mrf.mxu0
    %v887 = vadd.f32 %v816, %v886
    %v888 = vpop.f32.mrf.mxu0
    %v889 = vadd.f32 %v818, %v888
    %890 = vdwg.mxu0
    %891 = vmatprep.subr.mxu0 %v466
    %892 = vmatpush1.msra.mxu0 %v465
    %893 = vmatprep.subr.mxu0 %v464
    %894 = vmatpush1.msra.mxu0 %v463
    %895 = vmatprep.subr.mxu0 %v462
    %896 = vmatpush1.msra.mxu0 %v461
    %897 = vmatprep.subr.mxu0 %v460
    %898 = vmatpush1.msra.mxu0 %v459
    %899 = vmatprep.subr.mxu0 %v458
    %900 = vmatpush1.msra.mxu0 %v457
    %901 = vmatprep.subr.mxu0 %v456
    %902 = vmatpush1.msra.mxu0 %v455
    %903 = vmatprep.subr.mxu0 %v454
    %904 = vmatpush1.msra.mxu0 %v453
    %905 = vmatprep.subr.mxu0 %v452
    %906 = vmatpush1.msra.mxu0 %v451
    %907 = vmatprep.subr.mxu0 %v450
    %908 = vmatpush1.msra.mxu0 %v449
    %909 = vmatprep.subr.mxu0 %v448
    %910 = vmatpush1.msra.mxu0 %v447
    %911 = vmatprep.subr.mxu0 %v446
    %912 = vmatpush1.msra.mxu0 %v445
    %913 = vmatprep.subr.mxu0 %v444
    %914 = vmatpush1.msra.mxu0 %v443
    %915 = vmatprep.subr.mxu0 %v442
    %916 = vmatpush1.msra.mxu0 %v441
    %917 = vmatprep.subr.mxu0 %v440
    %918 = vmatpush1.msra.mxu0 %v439
    %919 = vmatprep.subr.mxu0 %v438
    %920 = vmatpush1.msra.mxu0 %v437
    %921 = vmatprep.subr.mxu0 %v436
    %922 = vmatpush1.msra.mxu0 %v435
    %923 = vmatprep.subr.mxu0 %v498
    %924 = vmatpush2.msra.mxu0 %v497
    %925 = vmatprep.subr.mxu0 %v496
    %926 = vmatpush2.msra.mxu0 %v495
    %927 = vmatprep.subr.mxu0 %v494
    %928 = vmatpush2.msra.mxu0 %v493
    %929 = vmatprep.subr.mxu0 %v492
    %930 = vmatpush2.msra.mxu0 %v491
    %931 = vmatprep.subr.mxu0 %v490
    %932 = vmatpush2.msra.mxu0 %v489
    %933 = vmatprep.subr.mxu0 %v488
    %934 = vmatpush2.msra.mxu0 %v487
    %935 = vmatprep.subr.mxu0 %v486
    %936 = vmatpush2.msra.mxu0 %v485
    %937 = vmatprep.subr.mxu0 %v484
    %938 = vmatpush2.msra.mxu0 %v483
    %939 = vmatprep.subr.mxu0 %v482
    %940 = vmatpush2.msra.mxu0 %v481
    %941 = vmatprep.subr.mxu0 %v480
    %942 = vmatpush2.msra.mxu0 %v479
    %943 = vmatprep.subr.mxu0 %v478
    %944 = vmatpush2.msra.mxu0 %v477
    %945 = vmatprep.subr.mxu0 %v476
    %946 = vmatpush2.msra.mxu0 %v475
    %947 = vmatprep.subr.mxu0 %v474
    %948 = vmatpush2.msra.mxu0 %v473
    %949 = vmatprep.subr.mxu0 %v472
    %950 = vmatpush2.msra.mxu0 %v471
    %951 = vmatprep.subr.mxu0 %v470
    %952 = vmatpush2.msra.mxu0 %v469
    %953 = vmatprep.subr.mxu0 %v468
    %954 = vmatpush2.msra.mxu0 %v467
    %955 = vmatprep.mubr.f32.mxu0 %v175
    %956 = vmatmul.mubr.f32.gmra.mxu0 %v174
    %v957 = vpop.f32.mrf.mxu0
    %v958 = vadd.f32 %v887, %v957
    %v959 = vpop.f32.mrf.mxu0
    %v960 = vadd.f32 %v889, %v959
    %961 = vdwg.mxu0
    %962 = vmatprep.subr.mxu0 %v530
    %963 = vmatpush1.msra.mxu0 %v529
    %964 = vmatprep.subr.mxu0 %v528
    %965 = vmatpush1.msra.mxu0 %v527
    %966 = vmatprep.subr.mxu0 %v526
    %967 = vmatpush1.msra.mxu0 %v525
    %968 = vmatprep.subr.mxu0 %v524
    %969 = vmatpush1.msra.mxu0 %v523
    %970 = vmatprep.subr.mxu0 %v522
    %971 = vmatpush1.msra.mxu0 %v521
    %972 = vmatprep.subr.mxu0 %v520
    %973 = vmatpush1.msra.mxu0 %v519
    %974 = vmatprep.subr.mxu0 %v518
    %975 = vmatpush1.msra.mxu0 %v517
    %976 = vmatprep.subr.mxu0 %v516
    %977 = vmatpush1.msra.mxu0 %v515
    %978 = vmatprep.subr.mxu0 %v514
    %979 = vmatpush1.msra.mxu0 %v513
    %980 = vmatprep.subr.mxu0 %v512
    %981 = vmatpush1.msra.mxu0 %v511
    %982 = vmatprep.subr.mxu0 %v510
    %983 = vmatpush1.msra.mxu0 %v509
    %984 = vmatprep.subr.mxu0 %v508
    %985 = vmatpush1.msra.mxu0 %v507
    %986 = vmatprep.subr.mxu0 %v506
    %987 = vmatpush1.msra.mxu0 %v505
    %988 = vmatprep.subr.mxu0 %v504
    %989 = vmatpush1.msra.mxu0 %v503
    %990 = vmatprep.subr.mxu0 %v502
    %991 = vmatpush1.msra.mxu0 %v501
    %992 = vmatprep.subr.mxu0 %v500
    %993 = vmatpush1.msra.mxu0 %v499
    %994 = vmatprep.subr.mxu0 %v562
    %995 = vmatpush2.msra.mxu0 %v561
    %996 = vmatprep.subr.mxu0 %v560
    %997 = vmatpush2.msra.mxu0 %v559
    %998 = vmatprep.subr.mxu0 %v558
    %999 = vmatpush2.msra.mxu0 %v557
    %1000 = vmatprep.subr.mxu0 %v556
    %1001 = vmatpush2.msra.mxu0 %v555
    %1002 = vmatprep.subr.mxu0 %v554
    %1003 = vmatpush2.msra.mxu0 %v553
    %1004 = vmatprep.subr.mxu0 %v552
    %1005 = vmatpush2.msra.mxu0 %v551
    %1006 = vmatprep.subr.mxu0 %v550
    %1007 = vmatpush2.msra.mxu0 %v549
    %1008 = vmatprep.subr.mxu0 %v548
    %1009 = vmatpush2.msra.mxu0 %v547
    %1010 = vmatprep.subr.mxu0 %v546
    %1011 = vmatpush2.msra.mxu0 %v545
    %1012 = vmatprep.subr.mxu0 %v544
    %1013 = vmatpush2.msra.mxu0 %v543
    %1014 = vmatprep.subr.mxu0 %v542
    %1015 = vmatpush2.msra.mxu0 %v541
    %1016 = vmatprep.subr.mxu0 %v540
    %1017 = vmatpush2.msra.mxu0 %v539
    %1018 = vmatprep.subr.mxu0 %v538
    %1019 = vmatpush2.msra.mxu0 %v537
    %1020 = vmatprep.subr.mxu0 %v536
    %1021 = vmatpush2.msra.mxu0 %v535
    %1022 = vmatprep.subr.mxu0 %v534
    %1023 = vmatpush2.msra.mxu0 %v533
    %1024 = vmatprep.subr.mxu0 %v532
    %1025 = vmatpush2.msra.mxu0 %v531
    %1026 = vmatprep.mubr.f32.mxu0 %v177
    %1027 = vmatmul.mubr.f32.gmra.mxu0 %v176
    %v1028 = vpop.f32.mrf.mxu0
    %v1029 = vadd.f32 %v958, %v1028
    %v1030 = vpop.f32.mrf.mxu0
    %v1031 = vadd.f32 %v960, %v1030
    %1032 = vdwg.mxu0
    %1033 = vmatprep.subr.mxu0 %v594
    %1034 = vmatpush1.msra.mxu0 %v593
    %1035 = vmatprep.subr.mxu0 %v592
    %1036 = vmatpush1.msra.mxu0 %v591
    %1037 = vmatprep.subr.mxu0 %v590
    %1038 = vmatpush1.msra.mxu0 %v589
    %1039 = vmatprep.subr.mxu0 %v588
    %1040 = vmatpush1.msra.mxu0 %v587
    %1041 = vmatprep.subr.mxu0 %v586
    %1042 = vmatpush1.msra.mxu0 %v585
    %1043 = vmatprep.subr.mxu0 %v584
    %1044 = vmatpush1.msra.mxu0 %v583
    %1045 = vmatprep.subr.mxu0 %v582
    %1046 = vmatpush1.msra.mxu0 %v581
    %1047 = vmatprep.subr.mxu0 %v580
    %1048 = vmatpush1.msra.mxu0 %v579
    %1049 = vmatprep.subr.mxu0 %v578
    %1050 = vmatpush1.msra.mxu0 %v577
    %1051 = vmatprep.subr.mxu0 %v576
    %1052 = vmatpush1.msra.mxu0 %v575
    %1053 = vmatprep.subr.mxu0 %v574
    %1054 = vmatpush1.msra.mxu0 %v573
    %1055 = vmatprep.subr.mxu0 %v572
    %1056 = vmatpush1.msra.mxu0 %v571
    %1057 = vmatprep.subr.mxu0 %v570
    %1058 = vmatpush1.msra.mxu0 %v569
    %1059 = vmatprep.subr.mxu0 %v568
    %1060 = vmatpush1.msra.mxu0 %v567
    %1061 = vmatprep.subr.mxu0 %v566
    %1062 = vmatpush1.msra.mxu0 %v565
    %1063 = vmatprep.subr.mxu0 %v564
    %1064 = vmatpush1.msra.mxu0 %v563
    %1065 = vmatprep.subr.mxu0 0.0
    %1066 = vmatpush2.msra.mxu0 0.0
    %1067 = vmatprep.subr.mxu0 0.0
    %1068 = vmatpush2.msra.mxu0 0.0
    %1069 = vmatprep.subr.mxu0 0.0
    %1070 = vmatpush2.msra.mxu0 0.0
    %1071 = vmatprep.subr.mxu0 0.0
    %1072 = vmatpush2.msra.mxu0 0.0
    %1073 = vmatprep.subr.mxu0 0.0
    %1074 = vmatpush2.msra.mxu0 0.0
    %1075 = vmatprep.subr.mxu0 0.0
    %1076 = vmatpush2.msra.mxu0 0.0
    %1077 = vmatprep.subr.mxu0 0.0
    %1078 = vmatpush2.msra.mxu0 0.0
    %1079 = vmatprep.subr.mxu0 0.0
    %1080 = vmatpush2.msra.mxu0 0.0
    %1081 = vmatprep.subr.mxu0 0.0
    %1082 = vmatpush2.msra.mxu0 0.0
    %1083 = vmatprep.subr.mxu0 0.0
    %1084 = vmatpush2.msra.mxu0 0.0
    %1085 = vmatprep.subr.mxu0 0.0
    %1086 = vmatpush2.msra.mxu0 0.0
    %1087 = vmatprep.subr.mxu0 0.0
    %1088 = vmatpush2.msra.mxu0 0.0
    %1089 = vmatprep.subr.mxu0 0.0
    %1090 = vmatpush2.msra.mxu0 0.0
    %1091 = vmatprep.subr.mxu0 0.0
    %1092 = vmatpush2.msra.mxu0 0.0
    %1093 = vmatprep.subr.mxu0 0.0
    %1094 = vmatpush2.msra.mxu0 0.0
    %1095 = vmatprep.subr.mxu0 0.0
    %1096 = vmatpush2.msra.mxu0 0.0
    %1097 = vmatprep.mubr.f32.mxu0 0.0
    %1098 = vmatmul.mubr.f32.gmra.mxu0 %v178
    %v1099 = vpop.f32.mrf.mxu0
    %v1100 = vadd.f32 %v1029, %v1099
    %v1101 = vpop.f32.mrf.mxu0
    %v1102 = vadd.f32 %v1031, %v1101
    %1103 = vdwg.mxu0
    %v1104 = vmax.f32 %v1100, 0.0
    %v1105 = vmax.f32 %v1102, 0.0
    %v1106 = vld [vmem:[%s4] sm:$0xff]
    %v1107 = vld [vmem:[%s4 + $0x8] sm:$0xff]
    %v1108 = vld [vmem:[%s4 + $0x10] sm:$0xff]
    %v1109 = vld [vmem:[%s4 + $0x18] sm:$0xff]
    %v1110 = vld [vmem:[%s4 + $0x20] sm:$0xff]
    %v1111 = vld [vmem:[%s4 + $0x28] sm:$0xff]
    %v1112 = vld [vmem:[%s4 + $0x30] sm:$0xff]
    %v1113 = vld [vmem:[%s4 + $0x38] sm:$0xff]
    %v1114 = vld [vmem:[%s4 + $0x40] sm:$0xff]
    %v1115 = vld [vmem:[%s4 + $0x48] sm:$0xff]
    %v1116 = vld [vmem:[%s4 + $0x50] sm:$0xff]
    %v1117 = vld [vmem:[%s4 + $0x58] sm:$0xff]
    %v1118 = vld [vmem:[%s4 + $0x60] sm:$0xff]
    %v1119 = vld [vmem:[%s4 + $0x68] sm:$0xff]
    %v1120 = vld [vmem:[%s4 + $0x70] sm:$0xff]
    %v1121 = vld [vmem:[%s4 + $0x78] sm:$0xff]
    %v1122 = vld [vmem:[%s4 + $0x80] sm:$0xff]
    %v1123 = vld [vmem:[%s4 + $0x88] sm:$0xff]
    %v1124 = vld [vmem:[%s4 + $0x90] sm:$0xff]
    %v1125 = vld [vmem:[%s4 + $0x98] sm:$0xff]
    %v1126 = vld [vmem:[%s4 + $0xa0] sm:$0xff]
    %v1127 = vld [vmem:[%s4 + $0xa8] sm:$0xff]
    %v1128 = vld [vmem:[%s4 + $0xb0] sm:$0xff]
    %v1129 = vld [vmem:[%s4 + $0xb8] sm:$0xff]
    %v1130 = vld [vmem:[%s4 + $0xc0] sm:$0xff]
    %v1131 = vld [vmem:[%s4 + $0xc8] sm:$0xff]
    %v1132 = vld [vmem:[%s4 + $0xd0] sm:$0xff]
    %v1133 = vld [vmem:[%s4 + $0xd8] sm:$0xff]
    %v1134 = vld [vmem:[%s4 + $0xe0] sm:$0xff]
    %v1135 = vld [vmem:[%s4 + $0xe8] sm:$0xff]
    %v1136 = vld [vmem:[%s4 + $0xf0] sm:$0xff]
    %v1137 = vld [vmem:[%s4 + $0xf8] sm:$0xff]
    %v1138 = vld [vmem:[#allocation9] sm:$0x1]
    %v1140 = vlaneseq
    %v1141 = vshrl.u32 %v1140, 7
    %v1142 = vsub.s32 0, %v1141
    %v1143 = vrot.slane %v1138, %v1142
    %1145 = vmatprep.subr.mxu0 0.0
    %1146 = vmatpush1.msra.mxu0 %v1121
    %1147 = vmatprep.subr.mxu0 0.0
    %1148 = vmatpush1.msra.mxu0 %v1120
    %1149 = vmatprep.subr.mxu0 0.0
    %1150 = vmatpush1.msra.mxu0 %v1119
    %1151 = vmatprep.subr.mxu0 0.0
    %1152 = vmatpush1.msra.mxu0 %v1118
    %1153 = vmatprep.subr.mxu0 0.0
    %1154 = vmatpush1.msra.mxu0 %v1117
    %1155 = vmatprep.subr.mxu0 0.0
    %1156 = vmatpush1.msra.mxu0 %v1116
    %1157 = vmatprep.subr.mxu0 0.0
    %1158 = vmatpush1.msra.mxu0 %v1115
    %1159 = vmatprep.subr.mxu0 0.0
    %1160 = vmatpush1.msra.mxu0 %v1114
    %1161 = vmatprep.subr.mxu0 0.0
    %1162 = vmatpush1.msra.mxu0 %v1113
    %1163 = vmatprep.subr.mxu0 0.0
    %1164 = vmatpush1.msra.mxu0 %v1112
    %1165 = vmatprep.subr.mxu0 0.0
    %1166 = vmatpush1.msra.mxu0 %v1111
    %1167 = vmatprep.subr.mxu0 0.0
    %1168 = vmatpush1.msra.mxu0 %v1110
    %1169 = vmatprep.subr.mxu0 0.0
    %1170 = vmatpush1.msra.mxu0 %v1109
    %1171 = vmatprep.subr.mxu0 0.0
    %1172 = vmatpush1.msra.mxu0 %v1108
    %1173 = vmatprep.subr.mxu0 0.0
    %1174 = vmatpush1.msra.mxu0 %v1107
    %1175 = vmatprep.subr.mxu0 0.0
    %1176 = vmatpush1.msra.mxu0 %v1106
    %1177 = vmatprep.subr.mxu0 0.0
    %1178 = vmatpush2.msra.mxu0 %v1137
    %1179 = vmatprep.subr.mxu0 0.0
    %1180 = vmatpush2.msra.mxu0 %v1136
    %1181 = vmatprep.subr.mxu0 0.0
    %1182 = vmatpush2.msra.mxu0 %v1135
    %1183 = vmatprep.subr.mxu0 0.0
    %1184 = vmatpush2.msra.mxu0 %v1134
    %1185 = vmatprep.subr.mxu0 0.0
    %1186 = vmatpush2.msra.mxu0 %v1133
    %1187 = vmatprep.subr.mxu0 0.0
    %1188 = vmatpush2.msra.mxu0 %v1132
    %1189 = vmatprep.subr.mxu0 0.0
    %1190 = vmatpush2.msra.mxu0 %v1131
    %1191 = vmatprep.subr.mxu0 0.0
    %1192 = vmatpush2.msra.mxu0 %v1130
    %1193 = vmatprep.subr.mxu0 0.0
    %1194 = vmatpush2.msra.mxu0 %v1129
    %1195 = vmatprep.subr.mxu0 0.0
    %1196 = vmatpush2.msra.mxu0 %v1128
    %1197 = vmatprep.subr.mxu0 0.0
    %1198 = vmatpush2.msra.mxu0 %v1127
    %1199 = vmatprep.subr.mxu0 0.0
    %1200 = vmatpush2.msra.mxu0 %v1126
    %1201 = vmatprep.subr.mxu0 0.0
    %1202 = vmatpush2.msra.mxu0 %v1125
    %1203 = vmatprep.subr.mxu0 0.0
    %1204 = vmatpush2.msra.mxu0 %v1124
    %1205 = vmatprep.subr.mxu0 0.0
    %1206 = vmatpush2.msra.mxu0 %v1123
    %1207 = vmatprep.subr.mxu0 0.0
    %1208 = vmatpush2.msra.mxu0 %v1122
    %1209 = vmatprep.mubr.f32.mxu0 %v1105
    %1210 = vmatmul.mubr.f32.gmra.mxu0 %v1104
    %v1211 = vpop.f32.mrf.mxu0
    %v1212 = vadd.f32 %v1143, %v1211
    %v1213 = vpop.f32.mrf.mxu0
    %1214 = vdwg.mxu0
    %v1215 = vmax.f32 %v1212, 0.0
    %v1216 = vld [vmem:[#allocation4] sm:$0xff]
    %v1217 = vld [vmem:[#allocation10] sm:$0xff]
    %v1218 = vld [vmem:[#allocation10 + $0x8] sm:$0x1]
    %v1219 = vld [vmem:[#allocation12] sm:$0x1]
    %v1221 = vlaneseq
    %v1222 = vshrl.u32 %v1221, 7
    %v1223 = vsub.s32 0, %v1222
    %v1224 = vrot.slane %v1219, %v1223
    %vm1226 = vcmask 72704
    %v1228 = vsel %vm1226, %v1216, 0
    %vm1230 = vcmask 1040384
    %v1232 = vsel %vm1230, %v1218, 0
    %1234 = vmatprep.subr.mxu0 0.0
    %1235 = vmatpush1.msra.mxu0 0.0
    %1236 = vmatprep.subr.mxu0 0.0
    %1237 = vmatpush1.msra.mxu0 0.0
    %1238 = vmatprep.subr.mxu0 0.0
    %1239 = vmatpush1.msra.mxu0 0.0
    %1240 = vmatprep.subr.mxu0 0.0
    %1241 = vmatpush1.msra.mxu0 0.0
    %1242 = vmatprep.subr.mxu0 0.0
    %1243 = vmatpush1.msra.mxu0 0.0
    %1244 = vmatprep.subr.mxu0 0.0
    %1245 = vmatpush1.msra.mxu0 0.0
    %1246 = vmatprep.subr.mxu0 0.0
    %1247 = vmatpush1.msra.mxu0 0.0
    %1248 = vmatprep.subr.mxu0 0.0
    %1249 = vmatpush1.msra.mxu0 0.0
    %1250 = vmatprep.subr.mxu0 0.0
    %1251 = vmatpush1.msra.mxu0 0.0
    %1252 = vmatprep.subr.mxu0 0.0
    %1253 = vmatpush1.msra.mxu0 0.0
    %1254 = vmatprep.subr.mxu0 0.0
    %1255 = vmatpush1.msra.mxu0 0.0
    %1256 = vmatprep.subr.mxu0 0.0
    %1257 = vmatpush1.msra.mxu0 0.0
    %1258 = vmatprep.subr.mxu0 0.0
    %1259 = vmatpush1.msra.mxu0 0.0
    %1260 = vmatprep.subr.mxu0 0.0
    %1261 = vmatpush1.msra.mxu0 0.0
    %1262 = vmatprep.subr.mxu0 0.0
    %1263 = vmatpush1.msra.mxu0 %v1232
    %1264 = vmatprep.subr.mxu0 0.0
    %1265 = vmatpush1.msra.mxu0 %v1217
    %1266 = vmatprep.subr.mxu0 0.0
    %1267 = vmatpush2.msra.mxu0 0.0
    %1268 = vmatprep.subr.mxu0 0.0
    %1269 = vmatpush2.msra.mxu0 0.0
    %1270 = vmatprep.subr.mxu0 0.0
    %1271 = vmatpush2.msra.mxu0 0.0
    %1272 = vmatprep.subr.mxu0 0.0
    %1273 = vmatpush2.msra.mxu0 0.0
    %1274 = vmatprep.subr.mxu0 0.0
    %1275 = vmatpush2.msra.mxu0 0.0
    %1276 = vmatprep.subr.mxu0 0.0
    %1277 = vmatpush2.msra.mxu0 0.0
    %1278 = vmatprep.subr.mxu0 0.0
    %1279 = vmatpush2.msra.mxu0 0.0
    %1280 = vmatprep.subr.mxu0 0.0
    %1281 = vmatpush2.msra.mxu0 0.0
    %1282 = vmatprep.subr.mxu0 0.0
    %1283 = vmatpush2.msra.mxu0 0.0
    %1284 = vmatprep.subr.mxu0 0.0
    %1285 = vmatpush2.msra.mxu0 0.0
    %1286 = vmatprep.subr.mxu0 0.0
    %1287 = vmatpush2.msra.mxu0 0.0
    %1288 = vmatprep.subr.mxu0 0.0
    %1289 = vmatpush2.msra.mxu0 0.0
    %1290 = vmatprep.subr.mxu0 0.0
    %1291 = vmatpush2.msra.mxu0 0.0
    %1292 = vmatprep.subr.mxu0 0.0
    %1293 = vmatpush2.msra.mxu0 0.0
    %1294 = vmatprep.subr.mxu0 0.0
    %1295 = vmatpush2.msra.mxu0 0.0
    %1296 = vmatprep.subr.mxu0 0.0
    %1297 = vmatpush2.msra.mxu0 0.0
    %1298 = vmatprep.mubr.f32.mxu0 0.0
    %1299 = vmatmul.mubr.f32.gmra.mxu0 %v1228
    %v1300 = vpop.f32.mrf.mxu0
    %v1301 = vadd.f32 %v1224, %v1300
    %v1302 = vpop.f32.mrf.mxu0
    %1303 = vdwg.mxu0
    %v1304 = vmax.f32 %v1301, 0.0
    %v1305 = vld [vmem:[#allocation13] sm:$0xff]
    %v1306 = vld [vmem:[#allocation13 + $0x8] sm:$0xff]
    %v1307 = vld [vmem:[#allocation13 + $0x10] sm:$0xff]
    %v1308 = vld [vmem:[#allocation13 + $0x18] sm:$0xff]
    %v1309 = vld [vmem:[#allocation13 + $0x20] sm:$0xff]
    %v1310 = vld [vmem:[#allocation13 + $0x28] sm:$0xff]
    %v1311 = vld [vmem:[#allocation13 + $0x30] sm:$0xff]
    %v1312 = vld [vmem:[#allocation13 + $0x38] sm:$0xff]
    %v1313 = vld [vmem:[#allocation15] sm:$0x1]
    %v1315 = vlaneseq
    %v1316 = vshrl.u32 %v1315, 7
    %v1317 = vsub.s32 0, %v1316
    %v1318 = vrot.slane %v1313, %v1317
    %vm1320 = vcmask 523264
    %v1322 = vsel %vm1320, %v1304, 0
    %1324 = vmatprep.subr.mxu0 0.0
    %1325 = vmatpush1.msra.mxu0 0.0
    %1326 = vmatprep.subr.mxu0 0.0
    %1327 = vmatpush1.msra.mxu0 0.0
    %1328 = vmatprep.subr.mxu0 0.0
    %1329 = vmatpush1.msra.mxu0 0.0
    %1330 = vmatprep.subr.mxu0 0.0
    %1331 = vmatpush1.msra.mxu0 0.0
    %1332 = vmatprep.subr.mxu0 0.0
    %1333 = vmatpush1.msra.mxu0 0.0
    %1334 = vmatprep.subr.mxu0 0.0
    %1335 = vmatpush1.msra.mxu0 0.0
    %1336 = vmatprep.subr.mxu0 0.0
    %1337 = vmatpush1.msra.mxu0 0.0
    %1338 = vmatprep.subr.mxu0 0.0
    %1339 = vmatpush1.msra.mxu0 0.0
    %1340 = vmatprep.subr.mxu0 0.0
    %1341 = vmatpush1.msra.mxu0 %v1312
    %1342 = vmatprep.subr.mxu0 0.0
    %1343 = vmatpush1.msra.mxu0 %v1311
    %1344 = vmatprep.subr.mxu0 0.0
    %1345 = vmatpush1.msra.mxu0 %v1310
    %1346 = vmatprep.subr.mxu0 0.0
    %1347 = vmatpush1.msra.mxu0 %v1309
    %1348 = vmatprep.subr.mxu0 0.0
    %1349 = vmatpush1.msra.mxu0 %v1308
    %1350 = vmatprep.subr.mxu0 0.0
    %1351 = vmatpush1.msra.mxu0 %v1307
    %1352 = vmatprep.subr.mxu0 0.0
    %1353 = vmatpush1.msra.mxu0 %v1306
    %1354 = vmatprep.subr.mxu0 0.0
    %1355 = vmatpush1.msra.mxu0 %v1305
    %1356 = vmatprep.subr.mxu0 0.0
    %1357 = vmatpush2.msra.mxu0 0.0
    %1358 = vmatprep.subr.mxu0 0.0
    %1359 = vmatpush2.msra.mxu0 0.0
    %1360 = vmatprep.subr.mxu0 0.0
    %1361 = vmatpush2.msra.mxu0 0.0
    %1362 = vmatprep.subr.mxu0 0.0
    %1363 = vmatpush2.msra.mxu0 0.0
    %1364 = vmatprep.subr.mxu0 0.0
    %1365 = vmatpush2.msra.mxu0 0.0
    %1366 = vmatprep.subr.mxu0 0.0
    %1367 = vmatpush2.msra.mxu0 0.0
    %1368 = vmatprep.subr.mxu0 0.0
    %1369 = vmatpush2.msra.mxu0 0.0
    %1370 = vmatprep.subr.mxu0 0.0
    %1371 = vmatpush2.msra.mxu0 0.0
    %1372 = vmatprep.subr.mxu0 0.0
    %1373 = vmatpush2.msra.mxu0 0.0
    %1374 = vmatprep.subr.mxu0 0.0
    %1375 = vmatpush2.msra.mxu0 0.0
    %1376 = vmatprep.subr.mxu0 0.0
    %1377 = vmatpush2.msra.mxu0 0.0
    %1378 = vmatprep.subr.mxu0 0.0
    %1379 = vmatpush2.msra.mxu0 0.0
    %1380 = vmatprep.subr.mxu0 0.0
    %1381 = vmatpush2.msra.mxu0 0.0
    %1382 = vmatprep.subr.mxu0 0.0
    %1383 = vmatpush2.msra.mxu0 0.0
    %1384 = vmatprep.subr.mxu0 0.0
    %1385 = vmatpush2.msra.mxu0 0.0
    %1386 = vmatprep.subr.mxu0 0.0
    %1387 = vmatpush2.msra.mxu0 0.0
    %1388 = vmatprep.mubr.f32.mxu0 0.0
    %1389 = vmatmul.mubr.f32.gmra.mxu0 %v1322
    %v1390 = vpop.f32.mrf.mxu0
    %v1391 = vadd.f32 %v1318, %v1390
    %v1392 = vpop.f32.mrf.mxu0
    %1393 = vdwg.mxu0
    %v1394 = vmax.f32 %v1391, 0.0
    %v1395 = vld [vmem:[%s10] sm:$0xff]
    %v1396 = vld [vmem:[%s10 + $0x8] sm:$0xff]
    %v1397 = vld [vmem:[%s10 + $0x10] sm:$0xff]
    %v1398 = vld [vmem:[%s10 + $0x18] sm:$0xff]
    %v1399 = vld [vmem:[%s10 + $0x20] sm:$0xff]
    %v1400 = vld [vmem:[%s10 + $0x28] sm:$0xff]
    %v1401 = vld [vmem:[%s10 + $0x30] sm:$0xff]
    %v1402 = vld [vmem:[%s10 + $0x38] sm:$0xff]
    %v1403 = vld [vmem:[%s11] sm:$0xff]
    %v1404 = vld [vmem:[%s11 + $0x8] sm:$0xff]
    %v1405 = vld [vmem:[%s11 + $0x10] sm:$0xff]
    %v1406 = vld [vmem:[%s11 + $0x18] sm:$0xff]
    %v1407 = vld [vmem:[%s11 + $0x20] sm:$0xff]
    %v1408 = vld [vmem:[%s11 + $0x28] sm:$0xff]
    %v1409 = vld [vmem:[%s11 + $0x30] sm:$0xff]
    %v1410 = vld [vmem:[%s11 + $0x38] sm:$0xff]
    %v1412 = vsel %vm1320, %v1215, 0
    %1414 = vmatprep.subr.mxu0 0.0
    %1415 = vmatpush1.msra.mxu0 0.0
    %1416 = vmatprep.subr.mxu0 0.0
    %1417 = vmatpush1.msra.mxu0 0.0
    %1418 = vmatprep.subr.mxu0 0.0
    %1419 = vmatpush1.msra.mxu0 0.0
    %1420 = vmatprep.subr.mxu0 0.0
    %1421 = vmatpush1.msra.mxu0 0.0
    %1422 = vmatprep.subr.mxu0 0.0
    %1423 = vmatpush1.msra.mxu0 0.0
    %1424 = vmatprep.subr.mxu0 0.0
    %1425 = vmatpush1.msra.mxu0 0.0
    %1426 = vmatprep.subr.mxu0 0.0
    %1427 = vmatpush1.msra.mxu0 0.0
    %1428 = vmatprep.subr.mxu0 0.0
    %1429 = vmatpush1.msra.mxu0 0.0
    %1430 = vmatprep.subr.mxu0 0.0
    %1431 = vmatpush1.msra.mxu0 %v1410
    %1432 = vmatprep.subr.mxu0 0.0
    %1433 = vmatpush1.msra.mxu0 %v1409
    %1434 = vmatprep.subr.mxu0 0.0
    %1435 = vmatpush1.msra.mxu0 %v1408
    %1436 = vmatprep.subr.mxu0 0.0
    %1437 = vmatpush1.msra.mxu0 %v1407
    %1438 = vmatprep.subr.mxu0 0.0
    %1439 = vmatpush1.msra.mxu0 %v1406
    %1440 = vmatprep.subr.mxu0 0.0
    %1441 = vmatpush1.msra.mxu0 %v1405
    %1442 = vmatprep.subr.mxu0 0.0
    %1443 = vmatpush1.msra.mxu0 %v1404
    %1444 = vmatprep.subr.mxu0 0.0
    %1445 = vmatpush1.msra.mxu0 %v1403
    %1446 = vmatprep.subr.mxu0 0.0
    %1447 = vmatpush2.msra.mxu0 0.0
    %1448 = vmatprep.subr.mxu0 0.0
    %1449 = vmatpush2.msra.mxu0 0.0
    %1450 = vmatprep.subr.mxu0 0.0
    %1451 = vmatpush2.msra.mxu0 0.0
    %1452 = vmatprep.subr.mxu0 0.0
    %1453 = vmatpush2.msra.mxu0 0.0
    %1454 = vmatprep.subr.mxu0 0.0
    %1455 = vmatpush2.msra.mxu0 0.0
    %1456 = vmatprep.subr.mxu0 0.0
    %1457 = vmatpush2.msra.mxu0 0.0
    %1458 = vmatprep.subr.mxu0 0.0
    %1459 = vmatpush2.msra.mxu0 0.0
    %1460 = vmatprep.subr.mxu0 0.0
    %1461 = vmatpush2.msra.mxu0 0.0
    %1462 = vmatprep.subr.mxu0 0.0
    %1463 = vmatpush2.msra.mxu0 0.0
    %1464 = vmatprep.subr.mxu0 0.0
    %1465 = vmatpush2.msra.mxu0 0.0
    %1466 = vmatprep.subr.mxu0 0.0
    %1467 = vmatpush2.msra.mxu0 0.0
    %1468 = vmatprep.subr.mxu0 0.0
    %1469 = vmatpush2.msra.mxu0 0.0
    %1470 = vmatprep.subr.mxu0 0.0
    %1471 = vmatpush2.msra.mxu0 0.0
    %1472 = vmatprep.subr.mxu0 0.0
    %1473 = vmatpush2.msra.mxu0 0.0
    %1474 = vmatprep.subr.mxu0 0.0
    %1475 = vmatpush2.msra.mxu0 0.0
    %1476 = vmatprep.subr.mxu0 0.0
    %1477 = vmatpush2.msra.mxu0 0.0
    %1478 = vmatprep.mubr.f32.mxu0 0.0
    %1479 = vmatmul.mubr.f32.gmra.mxu0 %v1412
    %v1480 = vpop.f32.mrf.mxu0
    %v1481 = vadd.f32 0.0, %v1480
    %v1482 = vpop.f32.mrf.mxu0
    %1483 = vdwg.mxu0
    %v1485 = vsel %vm1320, %v1394, 0
    %1487 = vmatprep.subr.mxu0 0.0
    %1488 = vmatpush1.msra.mxu0 0.0
    %1489 = vmatprep.subr.mxu0 0.0
    %1490 = vmatpush1.msra.mxu0 0.0
    %1491 = vmatprep.subr.mxu0 0.0
    %1492 = vmatpush1.msra.mxu0 0.0
    %1493 = vmatprep.subr.mxu0 0.0
    %1494 = vmatpush1.msra.mxu0 0.0
    %1495 = vmatprep.subr.mxu0 0.0
    %1496 = vmatpush1.msra.mxu0 0.0
    %1497 = vmatprep.subr.mxu0 0.0
    %1498 = vmatpush1.msra.mxu0 0.0
    %1499 = vmatprep.subr.mxu0 0.0
    %1500 = vmatpush1.msra.mxu0 0.0
    %1501 = vmatprep.subr.mxu0 0.0
    %1502 = vmatpush1.msra.mxu0 0.0
    %1503 = vmatprep.subr.mxu0 0.0
    %1504 = vmatpush1.msra.mxu0 %v1402
    %1505 = vmatprep.subr.mxu0 0.0
    %1506 = vmatpush1.msra.mxu0 %v1401
    %1507 = vmatprep.subr.mxu0 0.0
    %1508 = vmatpush1.msra.mxu0 %v1400
    %1509 = vmatprep.subr.mxu0 0.0
    %1510 = vmatpush1.msra.mxu0 %v1399
    %1511 = vmatprep.subr.mxu0 0.0
    %1512 = vmatpush1.msra.mxu0 %v1398
    %1513 = vmatprep.subr.mxu0 0.0
    %1514 = vmatpush1.msra.mxu0 %v1397
    %1515 = vmatprep.subr.mxu0 0.0
    %1516 = vmatpush1.msra.mxu0 %v1396
    %1517 = vmatprep.subr.mxu0 0.0
    %1518 = vmatpush1.msra.mxu0 %v1395
    %1519 = vmatprep.subr.mxu0 0.0
    %1520 = vmatpush2.msra.mxu0 0.0
    %1521 = vmatprep.subr.mxu0 0.0
    %1522 = vmatpush2.msra.mxu0 0.0
    %1523 = vmatprep.subr.mxu0 0.0
    %1524 = vmatpush2.msra.mxu0 0.0
    %1525 = vmatprep.subr.mxu0 0.0
    %1526 = vmatpush2.msra.mxu0 0.0
    %1527 = vmatprep.subr.mxu0 0.0
    %1528 = vmatpush2.msra.mxu0 0.0
    %1529 = vmatprep.subr.mxu0 0.0
    %1530 = vmatpush2.msra.mxu0 0.0
    %1531 = vmatprep.subr.mxu0 0.0
    %1532 = vmatpush2.msra.mxu0 0.0
    %1533 = vmatprep.subr.mxu0 0.0
    %1534 = vmatpush2.msra.mxu0 0.0
    %1535 = vmatprep.subr.mxu0 0.0
    %1536 = vmatpush2.msra.mxu0 0.0
    %1537 = vmatprep.subr.mxu0 0.0
    %1538 = vmatpush2.msra.mxu0 0.0
    %1539 = vmatprep.subr.mxu0 0.0
    %1540 = vmatpush2.msra.mxu0 0.0
    %1541 = vmatprep.subr.mxu0 0.0
    %1542 = vmatpush2.msra.mxu0 0.0
    %1543 = vmatprep.subr.mxu0 0.0
    %1544 = vmatpush2.msra.mxu0 0.0
    %1545 = vmatprep.subr.mxu0 0.0
    %1546 = vmatpush2.msra.mxu0 0.0
    %1547 = vmatprep.subr.mxu0 0.0
    %1548 = vmatpush2.msra.mxu0 0.0
    %1549 = vmatprep.subr.mxu0 0.0
    %1550 = vmatpush2.msra.mxu0 0.0
    %1551 = vmatprep.mubr.f32.mxu0 0.0
    %1552 = vmatmul.mubr.f32.gmra.mxu0 %v1485
    %v1553 = vpop.f32.mrf.mxu0
    %v1554 = vadd.f32 %v1481, %v1553
    %v1555 = vpop.f32.mrf.mxu0
    %1556 = vdwg.mxu0
    %v1557 = vld [vmem:[#allocation16] sm:$0x1]
    %v1559 = vlaneseq
    %v1560 = vshrl.u32 %v1559, 7
    %v1561 = vsub.s32 0, %v1560
    %v1562 = vrot.slane %v1557, %v1561
    %v1564 = vadd.f32 %v1554, %v1562
    %vm1565 = vcmask 15360
    %v1566 = vsel %vm1565, %v1564, -inf
    %1567 = vmax.xlane.f32.xlu0 %v1566
    %v1568 = vpop.xlane.xlu0 %1567
    %v1569 = vsub.f32 %v1564, %v1568
    %v1570 = vmul.f32 %v1569, 1.442695
    %v1571 = vpow.pop %v1570
    %v1572 = vsel %vm1565, %v1571, 0.0
    %1573 = vadd.xlane.f32.xlu0 %v1572
    %v1574 = vpop.xlane.xlu0 %1573
    %v1575 = vrcp.pop %v1574
    %v1576 = vmul.f32 %v1571, %v1575
    %1577 = vst.msk [vmem:[%s13] sm:$0xff] %vm1565, %v1576
    // Predicated region
    $region94: #{tpu_custom_call.1} parent=1 // pred_check
      _
    $region95: #{tpu_custom_call.1} parent=1 // pred_check_branch
      %1579 = sbr.rel (0) target = $region97
    $region96: #{tpu_custom_call.1} parent=1 // pred_region
      _
    $region97: #{tpu_custom_call.1} parent=1 // pred_fallthru
      _
    // Predicated region
    $region98: #{tpu_custom_call.1} parent=1 // pred_check
      _
    $region99: #{tpu_custom_call.1} parent=1 // pred_check_branch
      %1581 = sbr.rel (0) target = $region101
    $region100: #{tpu_custom_call.1} parent=1 // pred_region
      _
    $region101: #{tpu_custom_call.1} parent=1 // pred_fallthru
      _
    %1582 = vsyncpa [#allocation3], 1
    %1583 = vsyncpa [#allocation5], 1
    %1584 = vsyncpa [#allocation8], 1
    %1585 = vsyncpa [#allocation11], 1
    %1586 = vsyncpa [#allocation14], 1
    %1587 = vsyncpa [#allocation17], 1

</llo_original>
